<compile_context>
chip_gen: v6e
topology: v6e:2x2x1
jax: 0.10.0
libtpu: 0.0.40
codegen_flags: <defaults>
</compile_context>

<pallas_src>
import jax
import jax.numpy as jnp
from jax.experimental import pallas as pl
from jax.experimental.pallas import tpu as pltpu

# ----------------------------- model config ---------------------------------
N_NODES = 8
IN_DIM = 4
EMBED_DIM = 32
N_HEADS = 4
HEAD_DIM = EMBED_DIM // N_HEADS
EMBED_DIM2 = 64          # hidden dim of the feed-forward block
OUT_DIM = 1
OUT_PAD = 128            # lane-dense decoder output width (sliced in the wrapper)
LANE_W = 128             # lane width of the packed parameter buffers
N_LAYERS = 2
BN_EPS = 1e-5
NEG_SLOPE = 0.2
HN = N_HEADS * N_NODES   # width of the per-head-concatenated score slab (= 32)

# dot_general dimension numbers (2-D, no batch dims)
NN = (((1,), (0,)), ((), ()))   # A @ B
NT = (((1,), (1,)), ((), ()))   # A @ B.T

# ---- packed weight-matrix buffer layout (row offsets, all multiples of 8) ----
WFC_OFF = 0
ERW_OFF = EMBED_DIM                      # fused dst-score projection (E, HN)
FFW1_OFF = 2 * EMBED_DIM                 # (E, E2)
FFW2_OFF = 3 * EMBED_DIM                 # (E2, E)
PER_LAYER_W_ROWS = 3 * EMBED_DIM + EMBED_DIM2          # 160
LAYER_BASE = 8                                          # embed_w occupies rows 0..IN_DIM
DEC_W_ROW = LAYER_BASE + N_LAYERS * PER_LAYER_W_ROWS    # 328
HMASK_ROW = DEC_W_ROW + EMBED_DIM                       # 360
WMAT_ROWS = HMASK_ROW + HN                              # 392

# ---- packed vector buffer layout (one row per vector) ----
EMBED_B_ROW = 0
LAYER_V_BASE = 1
VEC_PER_LAYER = 8
ATTNL_V, GATB_V, BN1G_V, BN1B_V, FFB1_V, FFB2_V, BN2G_V, BN2B_V = range(8)
DEC_B_ROW = LAYER_V_BASE + N_LAYERS * VEC_PER_LAYER     # 17
VVEC_ROWS = DEC_B_ROW + 1                               # 18


# ------------------------------- fused kernel --------------------------------
def fused_forward_kernel(x_ref, ebias_ref, wmat_ref, vvec_ref, o_ref):
    f32 = jnp.float32
    E, E2, H, N = EMBED_DIM, EMBED_DIM2, N_HEADS, N_NODES

    # graph / structural constants (static slices of the packed buffers are free)
    hmask = wmat_ref[HMASK_ROW:HMASK_ROW + HN, 0:E]     # (HN, E) head-block selector
    ebias = ebias_ref[...]                              # (N, HN) additive -1e30 edge mask

    # ---- embedding linear ----
    h = jax.lax.dot_general(x_ref[...], wmat_ref[0:IN_DIM, 0:E], NN,
                            preferred_element_type=f32) + vvec_ref[0:1, 0:E]

    # ---- attention layers (statically unrolled) ----
    for l in range(N_LAYERS):
        wb = LAYER_BASE + l * PER_LAYER_W_ROWS
        vb = LAYER_V_BASE + l * VEC_PER_LAYER
        wfc = wmat_ref[wb + WFC_OFF: wb + WFC_OFF + E, 0:E]
        er_w = wmat_ref[wb + ERW_OFF: wb + ERW_OFF + E, 0:HN]
        ff_w1 = wmat_ref[wb + FFW1_OFF: wb + FFW1_OFF + E, 0:E2]
        ff_w2 = wmat_ref[wb + FFW2_OFF: wb + FFW2_OFF + E2, 0:E]
        attn_l = vvec_ref[vb + ATTNL_V: vb + ATTNL_V + 1, 0:E]
        gat_b = vvec_ref[vb + GATB_V: vb + GATB_V + 1, 0:E]
        g1 = vvec_ref[vb + BN1G_V: vb + BN1G_V + 1, 0:E]
        b1 = vvec_ref[vb + BN1B_V: vb + BN1B_V + 1, 0:E]
        fb1 = vvec_ref[vb + FFB1_V: vb + FFB1_V + 1, 0:E2]
        fb2 = vvec_ref[vb + FFB2_V: vb + FFB2_V + 1, 0:E]
        g2 = vvec_ref[vb + BN2G_V: vb + BN2G_V + 1, 0:E]
        b2 = vvec_ref[vb + BN2B_V: vb + BN2B_V + 1, 0:E]

        # --- GATConv: projected features + independent dst-score projection ---
        feat = jax.lax.dot_general(h, wfc, NN, preferred_element_type=f32)      # (N, E)
        er_exp = jax.lax.dot_general(h, er_w, NN, preferred_element_type=f32)   # (N, HN)

        # block-diagonal feature matrix: fbd[h*N+u, c] = feat[u, c] iff c in head h
        fbd = jnp.concatenate([feat] * H, axis=0) * hmask                       # (HN, E)
        # src scores for all heads as one lane row: el_row[0, h*N+u]
        el_row = jax.lax.dot_general(attn_l, fbd, NT, preferred_element_type=f32)  # (1, HN)

        # one wide score slab for all heads; LeakyReLU then additive edge mask
        e = er_exp + el_row                                                     # (N, HN)
        e = jnp.where(e > 0, e, NEG_SLOPE * e) + ebias
        # single row-max is a valid stabilizer for every head (cancels in num/denom)
        m = jnp.max(e, axis=1, keepdims=True)
        p = jnp.exp(e - m)                                # masked entries underflow to 0
        # TODO(synk): zero in-degree nodes would make denom 0; DGL's default
        # allow_zero_in_degree=False forbids them (demo graph has self-loops).

        gat_num = jax.lax.dot_general(p, fbd, NN, preferred_element_type=f32)   # (N, E)
        denom = jax.lax.dot_general(p, hmask, NN, preferred_element_type=f32)   # (N, E)
        h1 = h + gat_num / denom + gat_b                  # GAT output + skip + bias

        # --- BatchNorm1d (training-mode batch stats; one-pass E[x^2]-E[x]^2) ---
        mean1 = jnp.mean(h1, axis=0, keepdims=True)
        var1 = jnp.maximum(jnp.mean(h1 * h1, axis=0, keepdims=True) - mean1 * mean1, 0.0)
        hbn = (h1 - mean1) * jax.lax.rsqrt(var1 + BN_EPS) * g1 + b1

        # --- feed-forward with skip ---
        z = jax.lax.dot_general(hbn, ff_w1, NN, preferred_element_type=f32) + fb1
        z = jnp.maximum(z, 0.0)
        z = jax.lax.dot_general(z, ff_w2, NN, preferred_element_type=f32) + fb2
        h2 = hbn + z

        # --- second BatchNorm1d ---
        mean2 = jnp.mean(h2, axis=0, keepdims=True)
        var2 = jnp.maximum(jnp.mean(h2 * h2, axis=0, keepdims=True) - mean2 * mean2, 0.0)
        h = (h2 - mean2) * jax.lax.rsqrt(var2 + BN_EPS) * g2 + b2

    # ---- decoder: lane-dense padded weights -> unmasked (8, 128) store ----
    o_ref[...] = jax.lax.dot_general(
        h, wmat_ref[DEC_W_ROW:DEC_W_ROW + E, 0:OUT_PAD], NN,
        preferred_element_type=f32) + vvec_ref[DEC_B_ROW:DEC_B_ROW + 1, 0:OUT_PAD]


# ------------------------------ wrappers -------------------------------------
def _vmem_spec():
    return pl.BlockSpec(memory_space=pltpu.MemorySpace.VMEM)


def prepare_fused_params(params):
    """Pack ALL model parameters into two lane-dense buffers (one-time cost)."""
    f32 = jnp.float32
    E, E2, H, N, Dh = EMBED_DIM, EMBED_DIM2, N_HEADS, N_NODES, HEAD_DIM

    # head-block selector: hmask[h*N+u, h*Dh+d] = 1
    hmask = jnp.zeros((HN, E), f32)
    for hd in range(H):
        hmask = hmask.at[hd * N:(hd + 1) * N, hd * Dh:(hd + 1) * Dh].set(1.0)
    # expand per-head dst scores across that head's lane block: e_expand[h, h*N+u] = 1
    e_expand = jnp.zeros((H, HN), f32)
    for hd in range(H):
        e_expand = e_expand.at[hd, hd * N:(hd + 1) * N].set(1.0)

    wmat = jnp.zeros((WMAT_ROWS, LANE_W), f32)
    vvec = jnp.zeros((VVEC_ROWS, LANE_W), f32)

    wmat = wmat.at[0:IN_DIM, 0:E].set(params["embed_w"])
    vvec = vvec.at[EMBED_B_ROW, 0:E].set(params["embed_b"].reshape(-1))

    for l, lp in enumerate(params["layers"]):
        wb = LAYER_BASE + l * PER_LAYER_W_ROWS
        vb = LAYER_V_BASE + l * VEC_PER_LAYER

        # attn_r packed as block matrix (E, H), then fused with wfc + lane expansion
        attn_r_blk = jnp.zeros((E, H), f32)
        for hd in range(H):
            attn_r_blk = attn_r_blk.at[hd * Dh:(hd + 1) * Dh, hd].set(lp["attn_r"][hd])
        er_w_exp = lp["wfc"] @ attn_r_blk @ e_expand        # (E, HN)

        wmat = wmat.at[wb + WFC_OFF: wb + WFC_OFF + E, 0:E].set(lp["wfc"])
        wmat = wmat.at[wb + ERW_OFF: wb + ERW_OFF + E, 0:HN].set(er_w_exp)
        wmat = wmat.at[wb + FFW1_OFF: wb + FFW1_OFF + E, 0:E2].set(lp["ff_w1"])
        wmat = wmat.at[wb + FFW2_OFF: wb + FFW2_OFF + E2, 0:E].set(lp["ff_w2"])

        vvec = vvec.at[vb + ATTNL_V, 0:E].set(lp["attn_l"].reshape(-1))
        vvec = vvec.at[vb + GATB_V, 0:E].set(lp["gat_bias"].reshape(-1))
        vvec = vvec.at[vb + BN1G_V, 0:E].set(lp["bn1_gamma"].reshape(-1))
        vvec = vvec.at[vb + BN1B_V, 0:E].set(lp["bn1_beta"].reshape(-1))
        vvec = vvec.at[vb + FFB1_V, 0:E2].set(lp["ff_b1"].reshape(-1))
        vvec = vvec.at[vb + FFB2_V, 0:E].set(lp["ff_b2"].reshape(-1))
        vvec = vvec.at[vb + BN2G_V, 0:E].set(lp["bn2_gamma"].reshape(-1))
        vvec = vvec.at[vb + BN2B_V, 0:E].set(lp["bn2_beta"].reshape(-1))

    wmat = wmat.at[DEC_W_ROW:DEC_W_ROW + E, 0:OUT_DIM].set(params["dec_w"])
    wmat = wmat.at[HMASK_ROW:HMASK_ROW + HN, 0:E].set(hmask)
    vvec = vvec.at[DEC_B_ROW, 0:OUT_DIM].set(params["dec_b"].reshape(-1))
    return wmat, vvec


def prepare_graph(adj):
    """Precompute the additive edge bias (in-adjacency, tiled across heads)."""
    bias = jnp.where(adj.T > 0.0, 0.0, -1e30).astype(jnp.float32)   # [dst, src]
    return jnp.tile(bias, (1, N_HEADS))                              # (N, H*N)


@jax.jit
def model_forward(wmat, vvec, ebias, x):
    out_pad = pl.pallas_call(
        fused_forward_kernel,
        out_shape=jax.ShapeDtypeStruct((N_NODES, OUT_PAD), jnp.float32),
        in_specs=[_vmem_spec(), _vmem_spec(), _vmem_spec(), _vmem_spec()],
        out_specs=_vmem_spec(),
    )(x, ebias, wmat, vvec)
    return out_pad[:, :OUT_DIM]


# --------------------------- pure-JAX reference ------------------------------
def ref_attention_layer(h, adj, p):
    edge_mask = adj > 0.0
    feat = h @ p["wfc"]
    outs = []
    for hd in range(N_HEADS):
        fh = feat[:, hd * HEAD_DIM:(hd + 1) * HEAD_DIM]
        el = jnp.sum(fh * p["attn_l"][hd:hd + 1, :], axis=1, keepdims=True)
        er = jnp.sum(fh * p["attn_r"][hd:hd + 1, :], axis=1, keepdims=True)
        e = el + er.T
        e = jnp.where(e > 0, e, NEG_SLOPE * e)
        e = jnp.where(edge_mask, e, -1e30)
        m = jnp.max(e, axis=0, keepdims=True)
        pe = jnp.where(edge_mask, jnp.exp(e - m), 0.0)
        alpha = pe / jnp.sum(pe, axis=0, keepdims=True)
        outs.append(alpha.T @ fh)
    h1 = h + jnp.concatenate(outs, axis=1) + p["gat_bias"]
    mean1 = jnp.mean(h1, axis=0, keepdims=True)
    var1 = jnp.mean((h1 - mean1) ** 2, axis=0, keepdims=True)
    hbn = (h1 - mean1) / jnp.sqrt(var1 + BN_EPS) * p["bn1_gamma"] + p["bn1_beta"]
    z = jnp.maximum(hbn @ p["ff_w1"] + p["ff_b1"], 0.0) @ p["ff_w2"] + p["ff_b2"]
    h2 = hbn + z
    mean2 = jnp.mean(h2, axis=0, keepdims=True)
    var2 = jnp.mean((h2 - mean2) ** 2, axis=0, keepdims=True)
    return (h2 - mean2) / jnp.sqrt(var2 + BN_EPS) * p["bn2_gamma"] + p["bn2_beta"]


def ref_forward(params, adj, x):
    h = x @ params["embed_w"] + params["embed_b"]
    for lp in params["layers"]:
        h = ref_attention_layer(h, adj, lp)
    return h @ params["dec_w"] + params["dec_b"]


# ----------------------------- parameter init --------------------------------
def init_params(key):
    def nrm(k, shape, scale=0.1):
        return scale * jax.random.normal(k, shape, dtype=jnp.float32)

    keys = jax.random.split(key, 4 + N_LAYERS)
    params = {
        "embed_w": nrm(keys[0], (IN_DIM, EMBED_DIM)),
        "embed_b": nrm(keys[1], (1, EMBED_DIM)),
        "dec_w": nrm(keys[2], (EMBED_DIM, OUT_DIM)),
        "dec_b": nrm(keys[3], (1, OUT_DIM)),
        "layers": [],
    }
    for li in range(N_LAYERS):
        lk = jax.random.split(keys[4 + li], 12)
        params["layers"].append({
            "wfc": nrm(lk[0], (EMBED_DIM, N_HEADS * HEAD_DIM)),
            "attn_l": nrm(lk[1], (N_HEADS, HEAD_DIM)),
            "attn_r": nrm(lk[2], (N_HEADS, HEAD_DIM)),
            "gat_bias": nrm(lk[3], (1, N_HEADS * HEAD_DIM)),
            "bn1_gamma": 1.0 + nrm(lk[4], (1, EMBED_DIM)),
            "bn1_beta": nrm(lk[5], (1, EMBED_DIM)),
            "ff_w1": nrm(lk[6], (EMBED_DIM, EMBED_DIM2)),
            "ff_b1": nrm(lk[7], (1, EMBED_DIM2)),
            "ff_w2": nrm(lk[8], (EMBED_DIM2, EMBED_DIM)),
            "ff_b2": nrm(lk[9], (1, EMBED_DIM)),
            "bn2_gamma": 1.0 + nrm(lk[10], (1, EMBED_DIM)),
            "bn2_beta": nrm(lk[11], (1, EMBED_DIM)),
        })
    return params


def make_ring_adjacency(n):
    # directed ring in both directions + self-loops (no zero in-degree nodes)
    adj = jnp.zeros((n, n), dtype=jnp.float32)
    idx = jnp.arange(n)
    adj = adj.at[idx, idx].set(1.0)
    adj = adj.at[idx, (idx + 1) % n].set(1.0)
    adj = adj.at[idx, (idx - 1) % n].set(1.0)
    return adj


# --------------------------------- main ---------------------------------------
if __name__ == "__main__":
    key = jax.random.PRNGKey(0)
    k_param, k_x = jax.random.split(key)

    params = init_params(k_param)
    wmat, vvec = prepare_fused_params(params)   # one-time param packing (2 buffers)
    x = jax.random.normal(k_x, (N_NODES, IN_DIM), dtype=jnp.float32)
    adj = make_ring_adjacency(N_NODES)
    ebias = prepare_graph(adj)                  # one-time graph preprocessing

    out = jax.block_until_ready(model_forward(wmat, vvec, ebias, x))

    ref = jax.block_until_ready(ref_forward(params, adj, x))
    assert out.shape == (N_NODES, OUT_DIM)
    assert jnp.allclose(out, ref, rtol=1e-4, atol=1e-4), (
        f"mismatch: max err {jnp.max(jnp.abs(out - ref))}"
    )

    print("KERNEL_OK")
</pallas_src>

<mosaic_0001>
module attributes {stable_mosaic.version = 11 : i64} {
  func.func @fused_forward_kernel(%arg0: memref<8x4xf32, #tpu.memory_space<vmem>>, %arg1: memref<8x32xf32, #tpu.memory_space<vmem>>, %arg2: memref<392x128xf32, #tpu.memory_space<vmem>>, %arg3: memref<18x128xf32, #tpu.memory_space<vmem>>, %arg4: memref<8x128xf32, #tpu.memory_space<vmem>>) attributes {dimension_semantics = [], scalar_prefetch = 0 : i64, scratch_operands = 0 : i64, tpu.core_type = #tpu.core_type<tc>} {
    %c360 = arith.constant 360 : index
    %c0 = arith.constant 0 : index
    %0 = vector.load %arg2[%c360, %c0] : memref<392x128xf32, #tpu.memory_space<vmem>>, vector<32x32xf32>
    %c0_0 = arith.constant 0 : index
    %c0_1 = arith.constant 0 : index
    %1 = vector.load %arg1[%c0_0, %c0_1] : memref<8x32xf32, #tpu.memory_space<vmem>>, vector<8x32xf32>
    %c0_2 = arith.constant 0 : index
    %c0_3 = arith.constant 0 : index
    %2 = vector.load %arg0[%c0_2, %c0_3] : memref<8x4xf32, #tpu.memory_space<vmem>>, vector<8x4xf32>
    %c0_4 = arith.constant 0 : index
    %c0_5 = arith.constant 0 : index
    %3 = vector.load %arg2[%c0_4, %c0_5] : memref<392x128xf32, #tpu.memory_space<vmem>>, vector<4x32xf32>
    %cst = arith.constant dense<0.000000e+00> : vector<8x32xf32>
    %4 = tpu.matmul %2, %3, %cst {dimension_numbers = #tpu.dot_dimension_numbers<[1], [0], [0], [1], [0, 0, 1, 1], [], []>} : vector<8x4xf32>, vector<4x32xf32>, vector<8x32xf32> -> vector<8x32xf32>
    %c0_6 = arith.constant 0 : index
    %c0_7 = arith.constant 0 : index
    %5 = vector.load %arg3[%c0_6, %c0_7] : memref<18x128xf32, #tpu.memory_space<vmem>>, vector<1x32xf32>
    %6 = vector.broadcast %5 : vector<1x32xf32> to vector<8x32xf32>
    %7 = arith.addf %4, %6 : vector<8x32xf32>
    %c8 = arith.constant 8 : index
    %c0_8 = arith.constant 0 : index
    %8 = vector.load %arg2[%c8, %c0_8] : memref<392x128xf32, #tpu.memory_space<vmem>>, vector<32x32xf32>
    %c40 = arith.constant 40 : index
    %c0_9 = arith.constant 0 : index
    %9 = vector.load %arg2[%c40, %c0_9] : memref<392x128xf32, #tpu.memory_space<vmem>>, vector<32x32xf32>
    %c72 = arith.constant 72 : index
    %c0_10 = arith.constant 0 : index
    %10 = vector.load %arg2[%c72, %c0_10] : memref<392x128xf32, #tpu.memory_space<vmem>>, vector<32x64xf32>
    %c104 = arith.constant 104 : index
    %c0_11 = arith.constant 0 : index
    %11 = vector.load %arg2[%c104, %c0_11] : memref<392x128xf32, #tpu.memory_space<vmem>>, vector<64x32xf32>
    %c1 = arith.constant 1 : index
    %c0_12 = arith.constant 0 : index
    %12 = vector.load %arg3[%c1, %c0_12] : memref<18x128xf32, #tpu.memory_space<vmem>>, vector<1x32xf32>
    %c2 = arith.constant 2 : index
    %c0_13 = arith.constant 0 : index
    %13 = vector.load %arg3[%c2, %c0_13] : memref<18x128xf32, #tpu.memory_space<vmem>>, vector<1x32xf32>
    %c3 = arith.constant 3 : index
    %c0_14 = arith.constant 0 : index
    %14 = vector.load %arg3[%c3, %c0_14] : memref<18x128xf32, #tpu.memory_space<vmem>>, vector<1x32xf32>
    %c4 = arith.constant 4 : index
    %c0_15 = arith.constant 0 : index
    %15 = vector.load %arg3[%c4, %c0_15] : memref<18x128xf32, #tpu.memory_space<vmem>>, vector<1x32xf32>
    %c5 = arith.constant 5 : index
    %c0_16 = arith.constant 0 : index
    %16 = vector.load %arg3[%c5, %c0_16] : memref<18x128xf32, #tpu.memory_space<vmem>>, vector<1x64xf32>
    %c6 = arith.constant 6 : index
    %c0_17 = arith.constant 0 : index
    %17 = vector.load %arg3[%c6, %c0_17] : memref<18x128xf32, #tpu.memory_space<vmem>>, vector<1x32xf32>
    %c7 = arith.constant 7 : index
    %c0_18 = arith.constant 0 : index
    %18 = vector.load %arg3[%c7, %c0_18] : memref<18x128xf32, #tpu.memory_space<vmem>>, vector<1x32xf32>
    %c8_19 = arith.constant 8 : index
    %c0_20 = arith.constant 0 : index
    %19 = vector.load %arg3[%c8_19, %c0_20] : memref<18x128xf32, #tpu.memory_space<vmem>>, vector<1x32xf32>
    %cst_21 = arith.constant dense<0.000000e+00> : vector<8x32xf32>
    %20 = tpu.matmul %7, %8, %cst_21 {dimension_numbers = #tpu.dot_dimension_numbers<[1], [0], [0], [1], [0, 0, 1, 1], [], []>} : vector<8x32xf32>, vector<32x32xf32>, vector<8x32xf32> -> vector<8x32xf32>
    %cst_22 = arith.constant dense<0.000000e+00> : vector<8x32xf32>
    %21 = tpu.matmul %7, %9, %cst_22 {dimension_numbers = #tpu.dot_dimension_numbers<[1], [0], [0], [1], [0, 0, 1, 1], [], []>} : vector<8x32xf32>, vector<32x32xf32>, vector<8x32xf32> -> vector<8x32xf32>
    %22 = tpu.concatenate %20, %20, %20, %20 in 0 : vector<8x32xf32>, vector<8x32xf32>, vector<8x32xf32>, vector<8x32xf32> -> vector<32x32xf32>
    %23 = arith.mulf %22, %0 : vector<32x32xf32>
    %cst_23 = arith.constant dense<0.000000e+00> : vector<1x32xf32>
    %24 = tpu.matmul %12, %23, %cst_23 {dimension_numbers = #tpu.dot_dimension_numbers<[1], [1], [0], [0], [0, 0, 1, 0], [], []>} : vector<1x32xf32>, vector<32x32xf32>, vector<1x32xf32> -> vector<1x32xf32>
    %25 = vector.broadcast %24 : vector<1x32xf32> to vector<8x32xf32>
    %26 = arith.addf %21, %25 : vector<8x32xf32>
    %cst_24 = arith.constant 0.000000e+00 : f32
    %27 = vector.broadcast %cst_24 : f32 to vector<8x32xf32>
    %28 = arith.cmpf ogt, %26, %27 : vector<8x32xf32>
    %cst_25 = arith.constant 2.000000e-01 : f32
    %29 = vector.broadcast %cst_25 : f32 to vector<8x32xf32>
    %30 = arith.mulf %29, %26 : vector<8x32xf32>
    %31 = arith.select %28, %26, %30 : vector<8x32xi1>, vector<8x32xf32>
    %32 = arith.addf %31, %1 : vector<8x32xf32>
    %cst_26 = arith.constant dense<0xFF800000> : vector<8xf32>
    %33 = vector.multi_reduction <maximumf>, %32, %cst_26 [1] : vector<8x32xf32> to vector<8xf32>
    %34 = vector.shape_cast %33 : vector<8xf32> to vector<8x1xf32>
    %35 = vector.broadcast %34 : vector<8x1xf32> to vector<8x32xf32>
    %36 = arith.subf %32, %35 : vector<8x32xf32>
    %37 = math.exp %36 : vector<8x32xf32>
    %cst_27 = arith.constant dense<0.000000e+00> : vector<8x32xf32>
    %38 = tpu.matmul %37, %23, %cst_27 {dimension_numbers = #tpu.dot_dimension_numbers<[1], [0], [0], [1], [0, 0, 1, 1], [], []>} : vector<8x32xf32>, vector<32x32xf32>, vector<8x32xf32> -> vector<8x32xf32>
    %cst_28 = arith.constant dense<0.000000e+00> : vector<8x32xf32>
    %39 = tpu.matmul %37, %0, %cst_28 {dimension_numbers = #tpu.dot_dimension_numbers<[1], [0], [0], [1], [0, 0, 1, 1], [], []>} : vector<8x32xf32>, vector<32x32xf32>, vector<8x32xf32> -> vector<8x32xf32>
    %40 = arith.divf %38, %39 : vector<8x32xf32>
    %41 = arith.addf %7, %40 : vector<8x32xf32>
    %42 = vector.broadcast %13 : vector<1x32xf32> to vector<8x32xf32>
    %43 = arith.addf %41, %42 : vector<8x32xf32>
    %cst_29 = arith.constant dense<0.000000e+00> : vector<32xf32>
    %44 = vector.multi_reduction <add>, %43, %cst_29 [0] : vector<8x32xf32> to vector<32xf32>
    %45 = vector.shape_cast %44 : vector<32xf32> to vector<1x32xf32>
    %cst_30 = arith.constant 8.000000e+00 : f32
    %46 = vector.broadcast %cst_30 : f32 to vector<1x32xf32>
    %47 = arith.divf %45, %46 : vector<1x32xf32>
    %48 = arith.mulf %43, %43 : vector<8x32xf32>
    %cst_31 = arith.constant dense<0.000000e+00> : vector<32xf32>
    %49 = vector.multi_reduction <add>, %48, %cst_31 [0] : vector<8x32xf32> to vector<32xf32>
    %50 = vector.shape_cast %49 : vector<32xf32> to vector<1x32xf32>
    %cst_32 = arith.constant 8.000000e+00 : f32
    %51 = vector.broadcast %cst_32 : f32 to vector<1x32xf32>
    %52 = arith.divf %50, %51 : vector<1x32xf32>
    %53 = arith.mulf %47, %47 : vector<1x32xf32>
    %54 = arith.subf %52, %53 : vector<1x32xf32>
    %cst_33 = arith.constant 0.000000e+00 : f32
    %55 = vector.broadcast %cst_33 : f32 to vector<1x32xf32>
    %56 = arith.maximumf %54, %55 : vector<1x32xf32>
    %57 = vector.broadcast %47 : vector<1x32xf32> to vector<8x32xf32>
    %58 = arith.subf %43, %57 : vector<8x32xf32>
    %cst_34 = arith.constant 9.99999974E-6 : f32
    %59 = vector.broadcast %cst_34 : f32 to vector<1x32xf32>
    %60 = arith.addf %56, %59 : vector<1x32xf32>
    %61 = math.rsqrt %60 : vector<1x32xf32>
    %62 = vector.broadcast %61 : vector<1x32xf32> to vector<8x32xf32>
    %63 = arith.mulf %58, %62 : vector<8x32xf32>
    %64 = vector.broadcast %14 : vector<1x32xf32> to vector<8x32xf32>
    %65 = arith.mulf %63, %64 : vector<8x32xf32>
    %66 = vector.broadcast %15 : vector<1x32xf32> to vector<8x32xf32>
    %67 = arith.addf %65, %66 : vector<8x32xf32>
    %cst_35 = arith.constant dense<0.000000e+00> : vector<8x64xf32>
    %68 = tpu.matmul %67, %10, %cst_35 {dimension_numbers = #tpu.dot_dimension_numbers<[1], [0], [0], [1], [0, 0, 1, 1], [], []>} : vector<8x32xf32>, vector<32x64xf32>, vector<8x64xf32> -> vector<8x64xf32>
    %69 = vector.broadcast %16 : vector<1x64xf32> to vector<8x64xf32>
    %70 = arith.addf %68, %69 : vector<8x64xf32>
    %cst_36 = arith.constant 0.000000e+00 : f32
    %71 = vector.broadcast %cst_36 : f32 to vector<8x64xf32>
    %72 = arith.maximumf %70, %71 : vector<8x64xf32>
    %cst_37 = arith.constant dense<0.000000e+00> : vector<8x32xf32>
    %73 = tpu.matmul %72, %11, %cst_37 {dimension_numbers = #tpu.dot_dimension_numbers<[1], [0], [0], [1], [0, 0, 1, 1], [], []>} : vector<8x64xf32>, vector<64x32xf32>, vector<8x32xf32> -> vector<8x32xf32>
    %74 = vector.broadcast %17 : vector<1x32xf32> to vector<8x32xf32>
    %75 = arith.addf %73, %74 : vector<8x32xf32>
    %76 = arith.addf %67, %75 : vector<8x32xf32>
    %cst_38 = arith.constant dense<0.000000e+00> : vector<32xf32>
    %77 = vector.multi_reduction <add>, %76, %cst_38 [0] : vector<8x32xf32> to vector<32xf32>
    %78 = vector.shape_cast %77 : vector<32xf32> to vector<1x32xf32>
    %cst_39 = arith.constant 8.000000e+00 : f32
    %79 = vector.broadcast %cst_39 : f32 to vector<1x32xf32>
    %80 = arith.divf %78, %79 : vector<1x32xf32>
    %81 = arith.mulf %76, %76 : vector<8x32xf32>
    %cst_40 = arith.constant dense<0.000000e+00> : vector<32xf32>
    %82 = vector.multi_reduction <add>, %81, %cst_40 [0] : vector<8x32xf32> to vector<32xf32>
    %83 = vector.shape_cast %82 : vector<32xf32> to vector<1x32xf32>
    %cst_41 = arith.constant 8.000000e+00 : f32
    %84 = vector.broadcast %cst_41 : f32 to vector<1x32xf32>
    %85 = arith.divf %83, %84 : vector<1x32xf32>
    %86 = arith.mulf %80, %80 : vector<1x32xf32>
    %87 = arith.subf %85, %86 : vector<1x32xf32>
    %cst_42 = arith.constant 0.000000e+00 : f32
    %88 = vector.broadcast %cst_42 : f32 to vector<1x32xf32>
    %89 = arith.maximumf %87, %88 : vector<1x32xf32>
    %90 = vector.broadcast %80 : vector<1x32xf32> to vector<8x32xf32>
    %91 = arith.subf %76, %90 : vector<8x32xf32>
    %cst_43 = arith.constant 9.99999974E-6 : f32
    %92 = vector.broadcast %cst_43 : f32 to vector<1x32xf32>
    %93 = arith.addf %89, %92 : vector<1x32xf32>
    %94 = math.rsqrt %93 : vector<1x32xf32>
    %95 = vector.broadcast %94 : vector<1x32xf32> to vector<8x32xf32>
    %96 = arith.mulf %91, %95 : vector<8x32xf32>
    %97 = vector.broadcast %18 : vector<1x32xf32> to vector<8x32xf32>
    %98 = arith.mulf %96, %97 : vector<8x32xf32>
    %99 = vector.broadcast %19 : vector<1x32xf32> to vector<8x32xf32>
    %100 = arith.addf %98, %99 : vector<8x32xf32>
    %c168 = arith.constant 168 : index
    %c0_44 = arith.constant 0 : index
    %101 = vector.load %arg2[%c168, %c0_44] : memref<392x128xf32, #tpu.memory_space<vmem>>, vector<32x32xf32>
    %c200 = arith.constant 200 : index
    %c0_45 = arith.constant 0 : index
    %102 = vector.load %arg2[%c200, %c0_45] : memref<392x128xf32, #tpu.memory_space<vmem>>, vector<32x32xf32>
    %c232 = arith.constant 232 : index
    %c0_46 = arith.constant 0 : index
    %103 = vector.load %arg2[%c232, %c0_46] : memref<392x128xf32, #tpu.memory_space<vmem>>, vector<32x64xf32>
    %c264 = arith.constant 264 : index
    %c0_47 = arith.constant 0 : index
    %104 = vector.load %arg2[%c264, %c0_47] : memref<392x128xf32, #tpu.memory_space<vmem>>, vector<64x32xf32>
    %c9 = arith.constant 9 : index
    %c0_48 = arith.constant 0 : index
    %105 = vector.load %arg3[%c9, %c0_48] : memref<18x128xf32, #tpu.memory_space<vmem>>, vector<1x32xf32>
    %c10 = arith.constant 10 : index
    %c0_49 = arith.constant 0 : index
    %106 = vector.load %arg3[%c10, %c0_49] : memref<18x128xf32, #tpu.memory_space<vmem>>, vector<1x32xf32>
    %c11 = arith.constant 11 : index
    %c0_50 = arith.constant 0 : index
    %107 = vector.load %arg3[%c11, %c0_50] : memref<18x128xf32, #tpu.memory_space<vmem>>, vector<1x32xf32>
    %c12 = arith.constant 12 : index
    %c0_51 = arith.constant 0 : index
    %108 = vector.load %arg3[%c12, %c0_51] : memref<18x128xf32, #tpu.memory_space<vmem>>, vector<1x32xf32>
    %c13 = arith.constant 13 : index
    %c0_52 = arith.constant 0 : index
    %109 = vector.load %arg3[%c13, %c0_52] : memref<18x128xf32, #tpu.memory_space<vmem>>, vector<1x64xf32>
    %c14 = arith.constant 14 : index
    %c0_53 = arith.constant 0 : index
    %110 = vector.load %arg3[%c14, %c0_53] : memref<18x128xf32, #tpu.memory_space<vmem>>, vector<1x32xf32>
    %c15 = arith.constant 15 : index
    %c0_54 = arith.constant 0 : index
    %111 = vector.load %arg3[%c15, %c0_54] : memref<18x128xf32, #tpu.memory_space<vmem>>, vector<1x32xf32>
    %c16 = arith.constant 16 : index
    %c0_55 = arith.constant 0 : index
    %112 = vector.load %arg3[%c16, %c0_55] : memref<18x128xf32, #tpu.memory_space<vmem>>, vector<1x32xf32>
    %cst_56 = arith.constant dense<0.000000e+00> : vector<8x32xf32>
    %113 = tpu.matmul %100, %101, %cst_56 {dimension_numbers = #tpu.dot_dimension_numbers<[1], [0], [0], [1], [0, 0, 1, 1], [], []>} : vector<8x32xf32>, vector<32x32xf32>, vector<8x32xf32> -> vector<8x32xf32>
    %cst_57 = arith.constant dense<0.000000e+00> : vector<8x32xf32>
    %114 = tpu.matmul %100, %102, %cst_57 {dimension_numbers = #tpu.dot_dimension_numbers<[1], [0], [0], [1], [0, 0, 1, 1], [], []>} : vector<8x32xf32>, vector<32x32xf32>, vector<8x32xf32> -> vector<8x32xf32>
    %115 = tpu.concatenate %113, %113, %113, %113 in 0 : vector<8x32xf32>, vector<8x32xf32>, vector<8x32xf32>, vector<8x32xf32> -> vector<32x32xf32>
    %116 = arith.mulf %115, %0 : vector<32x32xf32>
    %cst_58 = arith.constant dense<0.000000e+00> : vector<1x32xf32>
    %117 = tpu.matmul %105, %116, %cst_58 {dimension_numbers = #tpu.dot_dimension_numbers<[1], [1], [0], [0], [0, 0, 1, 0], [], []>} : vector<1x32xf32>, vector<32x32xf32>, vector<1x32xf32> -> vector<1x32xf32>
    %118 = vector.broadcast %117 : vector<1x32xf32> to vector<8x32xf32>
    %119 = arith.addf %114, %118 : vector<8x32xf32>
    %cst_59 = arith.constant 0.000000e+00 : f32
    %120 = vector.broadcast %cst_59 : f32 to vector<8x32xf32>
    %121 = arith.cmpf ogt, %119, %120 : vector<8x32xf32>
    %cst_60 = arith.constant 2.000000e-01 : f32
    %122 = vector.broadcast %cst_60 : f32 to vector<8x32xf32>
    %123 = arith.mulf %122, %119 : vector<8x32xf32>
    %124 = arith.select %121, %119, %123 : vector<8x32xi1>, vector<8x32xf32>
    %125 = arith.addf %124, %1 : vector<8x32xf32>
    %cst_61 = arith.constant dense<0xFF800000> : vector<8xf32>
    %126 = vector.multi_reduction <maximumf>, %125, %cst_61 [1] : vector<8x32xf32> to vector<8xf32>
    %127 = vector.shape_cast %126 : vector<8xf32> to vector<8x1xf32>
    %128 = vector.broadcast %127 : vector<8x1xf32> to vector<8x32xf32>
    %129 = arith.subf %125, %128 : vector<8x32xf32>
    %130 = math.exp %129 : vector<8x32xf32>
    %cst_62 = arith.constant dense<0.000000e+00> : vector<8x32xf32>
    %131 = tpu.matmul %130, %116, %cst_62 {dimension_numbers = #tpu.dot_dimension_numbers<[1], [0], [0], [1], [0, 0, 1, 1], [], []>} : vector<8x32xf32>, vector<32x32xf32>, vector<8x32xf32> -> vector<8x32xf32>
    %cst_63 = arith.constant dense<0.000000e+00> : vector<8x32xf32>
    %132 = tpu.matmul %130, %0, %cst_63 {dimension_numbers = #tpu.dot_dimension_numbers<[1], [0], [0], [1], [0, 0, 1, 1], [], []>} : vector<8x32xf32>, vector<32x32xf32>, vector<8x32xf32> -> vector<8x32xf32>
    %133 = arith.divf %131, %132 : vector<8x32xf32>
    %134 = arith.addf %100, %133 : vector<8x32xf32>
    %135 = vector.broadcast %106 : vector<1x32xf32> to vector<8x32xf32>
    %136 = arith.addf %134, %135 : vector<8x32xf32>
    %cst_64 = arith.constant dense<0.000000e+00> : vector<32xf32>
    %137 = vector.multi_reduction <add>, %136, %cst_64 [0] : vector<8x32xf32> to vector<32xf32>
    %138 = vector.shape_cast %137 : vector<32xf32> to vector<1x32xf32>
    %cst_65 = arith.constant 8.000000e+00 : f32
    %139 = vector.broadcast %cst_65 : f32 to vector<1x32xf32>
    %140 = arith.divf %138, %139 : vector<1x32xf32>
    %141 = arith.mulf %136, %136 : vector<8x32xf32>
    %cst_66 = arith.constant dense<0.000000e+00> : vector<32xf32>
    %142 = vector.multi_reduction <add>, %141, %cst_66 [0] : vector<8x32xf32> to vector<32xf32>
    %143 = vector.shape_cast %142 : vector<32xf32> to vector<1x32xf32>
    %cst_67 = arith.constant 8.000000e+00 : f32
    %144 = vector.broadcast %cst_67 : f32 to vector<1x32xf32>
    %145 = arith.divf %143, %144 : vector<1x32xf32>
    %146 = arith.mulf %140, %140 : vector<1x32xf32>
    %147 = arith.subf %145, %146 : vector<1x32xf32>
    %cst_68 = arith.constant 0.000000e+00 : f32
    %148 = vector.broadcast %cst_68 : f32 to vector<1x32xf32>
    %149 = arith.maximumf %147, %148 : vector<1x32xf32>
    %150 = vector.broadcast %140 : vector<1x32xf32> to vector<8x32xf32>
    %151 = arith.subf %136, %150 : vector<8x32xf32>
    %cst_69 = arith.constant 9.99999974E-6 : f32
    %152 = vector.broadcast %cst_69 : f32 to vector<1x32xf32>
    %153 = arith.addf %149, %152 : vector<1x32xf32>
    %154 = math.rsqrt %153 : vector<1x32xf32>
    %155 = vector.broadcast %154 : vector<1x32xf32> to vector<8x32xf32>
    %156 = arith.mulf %151, %155 : vector<8x32xf32>
    %157 = vector.broadcast %107 : vector<1x32xf32> to vector<8x32xf32>
    %158 = arith.mulf %156, %157 : vector<8x32xf32>
    %159 = vector.broadcast %108 : vector<1x32xf32> to vector<8x32xf32>
    %160 = arith.addf %158, %159 : vector<8x32xf32>
    %cst_70 = arith.constant dense<0.000000e+00> : vector<8x64xf32>
    %161 = tpu.matmul %160, %103, %cst_70 {dimension_numbers = #tpu.dot_dimension_numbers<[1], [0], [0], [1], [0, 0, 1, 1], [], []>} : vector<8x32xf32>, vector<32x64xf32>, vector<8x64xf32> -> vector<8x64xf32>
    %162 = vector.broadcast %109 : vector<1x64xf32> to vector<8x64xf32>
    %163 = arith.addf %161, %162 : vector<8x64xf32>
    %cst_71 = arith.constant 0.000000e+00 : f32
    %164 = vector.broadcast %cst_71 : f32 to vector<8x64xf32>
    %165 = arith.maximumf %163, %164 : vector<8x64xf32>
    %cst_72 = arith.constant dense<0.000000e+00> : vector<8x32xf32>
    %166 = tpu.matmul %165, %104, %cst_72 {dimension_numbers = #tpu.dot_dimension_numbers<[1], [0], [0], [1], [0, 0, 1, 1], [], []>} : vector<8x64xf32>, vector<64x32xf32>, vector<8x32xf32> -> vector<8x32xf32>
    %167 = vector.broadcast %110 : vector<1x32xf32> to vector<8x32xf32>
    %168 = arith.addf %166, %167 : vector<8x32xf32>
    %169 = arith.addf %160, %168 : vector<8x32xf32>
    %cst_73 = arith.constant dense<0.000000e+00> : vector<32xf32>
    %170 = vector.multi_reduction <add>, %169, %cst_73 [0] : vector<8x32xf32> to vector<32xf32>
    %171 = vector.shape_cast %170 : vector<32xf32> to vector<1x32xf32>
    %cst_74 = arith.constant 8.000000e+00 : f32
    %172 = vector.broadcast %cst_74 : f32 to vector<1x32xf32>
    %173 = arith.divf %171, %172 : vector<1x32xf32>
    %174 = arith.mulf %169, %169 : vector<8x32xf32>
    %cst_75 = arith.constant dense<0.000000e+00> : vector<32xf32>
    %175 = vector.multi_reduction <add>, %174, %cst_75 [0] : vector<8x32xf32> to vector<32xf32>
    %176 = vector.shape_cast %175 : vector<32xf32> to vector<1x32xf32>
    %cst_76 = arith.constant 8.000000e+00 : f32
    %177 = vector.broadcast %cst_76 : f32 to vector<1x32xf32>
    %178 = arith.divf %176, %177 : vector<1x32xf32>
    %179 = arith.mulf %173, %173 : vector<1x32xf32>
    %180 = arith.subf %178, %179 : vector<1x32xf32>
    %cst_77 = arith.constant 0.000000e+00 : f32
    %181 = vector.broadcast %cst_77 : f32 to vector<1x32xf32>
    %182 = arith.maximumf %180, %181 : vector<1x32xf32>
    %183 = vector.broadcast %173 : vector<1x32xf32> to vector<8x32xf32>
    %184 = arith.subf %169, %183 : vector<8x32xf32>
    %cst_78 = arith.constant 9.99999974E-6 : f32
    %185 = vector.broadcast %cst_78 : f32 to vector<1x32xf32>
    %186 = arith.addf %182, %185 : vector<1x32xf32>
    %187 = math.rsqrt %186 : vector<1x32xf32>
    %188 = vector.broadcast %187 : vector<1x32xf32> to vector<8x32xf32>
    %189 = arith.mulf %184, %188 : vector<8x32xf32>
    %190 = vector.broadcast %111 : vector<1x32xf32> to vector<8x32xf32>
    %191 = arith.mulf %189, %190 : vector<8x32xf32>
    %192 = vector.broadcast %112 : vector<1x32xf32> to vector<8x32xf32>
    %193 = arith.addf %191, %192 : vector<8x32xf32>
    %c328 = arith.constant 328 : index
    %c0_79 = arith.constant 0 : index
    %194 = vector.load %arg2[%c328, %c0_79] : memref<392x128xf32, #tpu.memory_space<vmem>>, vector<32x128xf32>
    %cst_80 = arith.constant dense<0.000000e+00> : vector<8x128xf32>
    %195 = tpu.matmul %193, %194, %cst_80 {dimension_numbers = #tpu.dot_dimension_numbers<[1], [0], [0], [1], [0, 0, 1, 1], [], []>} : vector<8x32xf32>, vector<32x128xf32>, vector<8x128xf32> -> vector<8x128xf32>
    %c17 = arith.constant 17 : index
    %c0_81 = arith.constant 0 : index
    %196 = vector.load %arg3[%c17, %c0_81] : memref<18x128xf32, #tpu.memory_space<vmem>>, vector<1x128xf32>
    %197 = vector.broadcast %196 : vector<1x128xf32> to vector<8x128xf32>
    %198 = arith.addf %195, %197 : vector<8x128xf32>
    %c0_82 = arith.constant 0 : index
    %c0_83 = arith.constant 0 : index
    %199 = vector.load %arg4[%c0_82, %c0_83] : memref<8x128xf32, #tpu.memory_space<vmem>>, vector<8x128xf32>
    tpu.vector_store %arg4[%c0_82, %c0_83], %198 {strides = array<i32>} : memref<8x128xf32, #tpu.memory_space<vmem>>, vector<8x128xf32>,
    return
  }
}

</mosaic_0001>

<llo_original>
// kernel: model_forward.1
$region0: #{model_forward.1}
  #allocation0 [shape = 'u32[]', space=smem, size = 0x4, offset = 0x4, fixed_abs, tag = 'smem constant byte address 0x4 - core index']
  #allocation1 [shape = 'u32[144,128]{1,0:T(1,128)}', space=vmem, size = 0x12000, scoped, tag = 'internal scratch']
  %s0 = inlined_call_operand.vmem [shape: f32[8,4], index: 0, kind: input, shape index: {}]
  %s1 = inlined_call_operand.vmem [shape: f32[8,32], index: 1, kind: input, shape index: {}]
  %s2 = inlined_call_operand.hbm [shape: f32[392,128], index: 2, kind: input, shape index: {}]
  %s3 = inlined_call_operand.hbm [shape: f32[18,128], index: 3, kind: input, shape index: {}]
  %s4 = inlined_call_operand.vmem [shape: f32[8,128], index: 4, kind: output, shape index: {}]
  %s5 = sld [smem:[#allocation0]]
  $region34: #{model_forward.1} parent=0
    _
  %s7 = ssub.s32 1, %s5
  %s8 = scalar_select 0, %s7, %s5
  $region1: #{model_forward.1} parent=0
    #allocation2 [shape = 'u8[200704]{0}', space=vmem, size = 0x31000, scoped, tag = 'input window, operand 2, single buffered']
    #allocation3 [shape = 's32[1]{0}', space=sflag, size = 0x4, scoped, tag = 'scoped memory for model_forward.1']
    #allocation4 [shape = 'u8[12288]{0}', space=vmem, size = 0x3000, scoped, tag = 'input window, operand 3, single buffered']
    #allocation5 [shape = 's32[1]{0}', space=sflag, size = 0x4, scoped, tag = 'scoped memory for model_forward.1']
    %9 = vsyncpa [#allocation3], 0
    %10 = vsyncpa [#allocation5], 0
    // Predicated region
    $region2: #{model_forward.1} parent=1 // pred_check
      _
    $region3: #{model_forward.1} parent=1 // pred_check_branch
      %12 = sbr.rel (0) target = $region5
    $region4: #{model_forward.1} parent=1 // pred_region
      _
    $region5: #{model_forward.1} parent=1 // pred_fallthru
      _
    // Predicated region
    $region6: #{model_forward.1} parent=1 // pred_check
      _
    $region7: #{model_forward.1} parent=1 // pred_check_branch
      %14 = sbr.rel (0) target = $region9
    $region8: #{model_forward.1} parent=1 // pred_region
      _
    $region9: #{model_forward.1} parent=1 // pred_fallthru
      _
    // Predicated region
    $region10: #{model_forward.1} parent=1 // pred_check
      _
    $region11: #{model_forward.1} parent=1 // pred_check_branch
      %16 = sbr.rel (0) target = $region13
    $region12: #{model_forward.1} parent=1 // pred_region
      %s18 = ssub.s32 6272, 6272
      %19 = vsyncadd [#allocation3], %s18
      %s20 = sshll.u32 [#allocation2], 4
      %s21 = int_to_ptr.vmem [resolvable:$true] %s20
      %26 = dma.hbm_to_vmem [thread:$0]  %s2, 6272, %s21, [#allocation3], 128, 128, 8
    $region13: #{model_forward.1} parent=1 // pred_fallthru
      _
    // Predicated region
    $region14: #{model_forward.1} parent=1 // pred_check
      _
    $region15: #{model_forward.1} parent=1 // pred_check_branch
      %28 = sbr.rel (0) target = $region17
    $region16: #{model_forward.1} parent=1 // pred_region
      %s30 = ssub.s32 384, 384
      %31 = vsyncadd [#allocation5], %s30
      %s32 = sshll.u32 [#allocation4], 4
      %s33 = int_to_ptr.vmem [resolvable:$true] %s32
      %38 = dma.hbm_to_vmem [thread:$0]  %s3, 384, %s33, [#allocation5], 128, 128, 8
    $region17: #{model_forward.1} parent=1 // pred_fallthru
      _
    // Predicated region
    $region18: #{model_forward.1} parent=1 // pred_check
      _
    $region19: #{model_forward.1} parent=1 // pred_check_branch
      %40 = sbr.rel (0) target = $region21
    $region20: #{model_forward.1} parent=1 // pred_region
      %41 = dma.done [#allocation3], 6272
    $region21: #{model_forward.1} parent=1 // pred_fallthru
      _
    // Predicated region
    $region22: #{model_forward.1} parent=1 // pred_check
      _
    $region23: #{model_forward.1} parent=1 // pred_check_branch
      %43 = sbr.rel (0) target = $region25
    $region24: #{model_forward.1} parent=1 // pred_region
      %44 = dma.done [#allocation5], 384
    $region25: #{model_forward.1} parent=1 // pred_fallthru
      _
    %v45 = vld [vmem:[#allocation2 + $0x168] sm:$0xff]
    %v46 = vld [vmem:[#allocation2 + $0x170] sm:$0xff]
    %v47 = vld [vmem:[#allocation2 + $0x178] sm:$0xff]
    %v48 = vld [vmem:[#allocation2 + $0x180] sm:$0xff]
    %v49 = vld [vmem:[%s1] sm:$0xff]
    %v50 = vld [vmem:[%s0] sm:$0xff]
    %v51 = vld [vmem:[#allocation2] sm:$0xf]
    %v52 = vld [vmem:[#allocation4] sm:$0x1]
    %v53 = vlaneseq
    %v54 = vshrl.u32 %v53, 7
    %v55 = vsub.s32 0, %v54
    %v56 = vrot.slane %v52, %v55
    %vm57 = vcmask 31744
    %v59 = vsel %vm57, %v50, 0
    %vm61 = vcmask 1043456
    %v63 = vsel %vm61, %v51, 0
    %65 = vmatprep.subr.mxu0 0.0
    %66 = vmatpush1.msra.mxu0 0.0
    %67 = vmatprep.subr.mxu0 0.0
    %68 = vmatpush1.msra.mxu0 0.0
    %69 = vmatprep.subr.mxu0 0.0
    %70 = vmatpush1.msra.mxu0 0.0
    %71 = vmatprep.subr.mxu0 0.0
    %72 = vmatpush1.msra.mxu0 0.0
    %73 = vmatprep.subr.mxu0 0.0
    %74 = vmatpush1.msra.mxu0 0.0
    %75 = vmatprep.subr.mxu0 0.0
    %76 = vmatpush1.msra.mxu0 0.0
    %77 = vmatprep.subr.mxu0 0.0
    %78 = vmatpush1.msra.mxu0 0.0
    %79 = vmatprep.subr.mxu0 0.0
    %80 = vmatpush1.msra.mxu0 0.0
    %81 = vmatprep.subr.mxu0 0.0
    %82 = vmatpush1.msra.mxu0 0.0
    %83 = vmatprep.subr.mxu0 0.0
    %84 = vmatpush1.msra.mxu0 0.0
    %85 = vmatprep.subr.mxu0 0.0
    %86 = vmatpush1.msra.mxu0 0.0
    %87 = vmatprep.subr.mxu0 0.0
    %88 = vmatpush1.msra.mxu0 0.0
    %89 = vmatprep.subr.mxu0 0.0
    %90 = vmatpush1.msra.mxu0 0.0
    %91 = vmatprep.subr.mxu0 0.0
    %92 = vmatpush1.msra.mxu0 0.0
    %93 = vmatprep.subr.mxu0 0.0
    %94 = vmatpush1.msra.mxu0 0.0
    %95 = vmatprep.subr.mxu0 0.0
    %96 = vmatpush1.msra.mxu0 %v63
    %97 = vmatprep.subr.mxu0 0.0
    %98 = vmatpush2.msra.mxu0 0.0
    %99 = vmatprep.subr.mxu0 0.0
    %100 = vmatpush2.msra.mxu0 0.0
    %101 = vmatprep.subr.mxu0 0.0
    %102 = vmatpush2.msra.mxu0 0.0
    %103 = vmatprep.subr.mxu0 0.0
    %104 = vmatpush2.msra.mxu0 0.0
    %105 = vmatprep.subr.mxu0 0.0
    %106 = vmatpush2.msra.mxu0 0.0
    %107 = vmatprep.subr.mxu0 0.0
    %108 = vmatpush2.msra.mxu0 0.0
    %109 = vmatprep.subr.mxu0 0.0
    %110 = vmatpush2.msra.mxu0 0.0
    %111 = vmatprep.subr.mxu0 0.0
    %112 = vmatpush2.msra.mxu0 0.0
    %113 = vmatprep.subr.mxu0 0.0
    %114 = vmatpush2.msra.mxu0 0.0
    %115 = vmatprep.subr.mxu0 0.0
    %116 = vmatpush2.msra.mxu0 0.0
    %117 = vmatprep.subr.mxu0 0.0
    %118 = vmatpush2.msra.mxu0 0.0
    %119 = vmatprep.subr.mxu0 0.0
    %120 = vmatpush2.msra.mxu0 0.0
    %121 = vmatprep.subr.mxu0 0.0
    %122 = vmatpush2.msra.mxu0 0.0
    %123 = vmatprep.subr.mxu0 0.0
    %124 = vmatpush2.msra.mxu0 0.0
    %125 = vmatprep.subr.mxu0 0.0
    %126 = vmatpush2.msra.mxu0 0.0
    %127 = vmatprep.subr.mxu0 0.0
    %128 = vmatpush2.msra.mxu0 0.0
    %129 = vmatprep.mubr.f32.mxu0 0.0
    %130 = vmatmul.mubr.f32.gmra.mxu0 %v59
    %v131 = vpop.f32.mrf.mxu0
    %v132 = vadd.f32 %v56, %v131
    %v133 = vpop.f32.mrf.mxu0
    %134 = vdwg.mxu0
    %v135 = vld [vmem:[#allocation2 + $0x8] sm:$0xff]
    %v136 = vld [vmem:[#allocation2 + $0x10] sm:$0xff]
    %v137 = vld [vmem:[#allocation2 + $0x18] sm:$0xff]
    %v138 = vld [vmem:[#allocation2 + $0x20] sm:$0xff]
    %v139 = vld [vmem:[#allocation2 + $0x28] sm:$0xff]
    %v140 = vld [vmem:[#allocation2 + $0x30] sm:$0xff]
    %v141 = vld [vmem:[#allocation2 + $0x38] sm:$0xff]
    %v142 = vld [vmem:[#allocation2 + $0x40] sm:$0xff]
    %v143 = vld [vmem:[#allocation2 + $0x48] sm:$0xff]
    %v144 = vld [vmem:[#allocation2 + $0x50] sm:$0xff]
    %v145 = vld [vmem:[#allocation2 + $0x58] sm:$0xff]
    %v146 = vld [vmem:[#allocation2 + $0x60] sm:$0xff]
    %v147 = vld [vmem:[#allocation2 + $0x68] sm:$0xff]
    %v148 = vld [vmem:[#allocation2 + $0x70] sm:$0xff]
    %v149 = vld [vmem:[#allocation2 + $0x78] sm:$0xff]
    %v150 = vld [vmem:[#allocation2 + $0x80] sm:$0xff]
    %v151 = vld [vmem:[#allocation2 + $0x88] sm:$0xff]
    %v152 = vld [vmem:[#allocation2 + $0x90] sm:$0xff]
    %v153 = vld [vmem:[#allocation2 + $0x98] sm:$0xff]
    %v154 = vld [vmem:[#allocation2 + $0xa0] sm:$0xff]
    %v155 = vld [vmem:[#allocation4 + $0x1] sm:$0x1]
    %v156 = vld [vmem:[#allocation4 + $0x2] sm:$0x1]
    %v157 = vld [vmem:[#allocation4 + $0x3] sm:$0x1]
    %v158 = vld [vmem:[#allocation4 + $0x4] sm:$0x1]
    %v159 = vld [vmem:[#allocation4 + $0x5] sm:$0x1]
    %v160 = vld [vmem:[#allocation4 + $0x6] sm:$0x1]
    %v161 = vld [vmem:[#allocation4 + $0x7] sm:$0x1]
    %v162 = vld [vmem:[#allocation4 + $0x8] sm:$0x1]
    %vm163 = vcmask 261120
    %v165 = vsel %vm163, %v132, 0
    %167 = vmatprep.subr.mxu0 0.0
    %168 = vmatpush1.msra.mxu0 0.0
    %169 = vmatprep.subr.mxu0 0.0
    %170 = vmatpush1.msra.mxu0 0.0
    %171 = vmatprep.subr.mxu0 0.0
    %172 = vmatpush1.msra.mxu0 0.0
    %173 = vmatprep.subr.mxu0 0.0
    %174 = vmatpush1.msra.mxu0 0.0
    %175 = vmatprep.subr.mxu0 0.0
    %176 = vmatpush1.msra.mxu0 0.0
    %177 = vmatprep.subr.mxu0 0.0
    %178 = vmatpush1.msra.mxu0 0.0
    %179 = vmatprep.subr.mxu0 0.0
    %180 = vmatpush1.msra.mxu0 0.0
    %181 = vmatprep.subr.mxu0 0.0
    %182 = vmatpush1.msra.mxu0 0.0
    %183 = vmatprep.subr.mxu0 0.0
    %184 = vmatpush1.msra.mxu0 0.0
    %185 = vmatprep.subr.mxu0 0.0
    %186 = vmatpush1.msra.mxu0 0.0
    %187 = vmatprep.subr.mxu0 0.0
    %188 = vmatpush1.msra.mxu0 0.0
    %189 = vmatprep.subr.mxu0 0.0
    %190 = vmatpush1.msra.mxu0 0.0
    %191 = vmatprep.subr.mxu0 0.0
    %192 = vmatpush1.msra.mxu0 %v138
    %193 = vmatprep.subr.mxu0 0.0
    %194 = vmatpush1.msra.mxu0 %v137
    %195 = vmatprep.subr.mxu0 0.0
    %196 = vmatpush1.msra.mxu0 %v136
    %197 = vmatprep.subr.mxu0 0.0
    %198 = vmatpush1.msra.mxu0 %v135
    %199 = vmatprep.subr.mxu0 0.0
    %200 = vmatpush2.msra.mxu0 0.0
    %201 = vmatprep.subr.mxu0 0.0
    %202 = vmatpush2.msra.mxu0 0.0
    %203 = vmatprep.subr.mxu0 0.0
    %204 = vmatpush2.msra.mxu0 0.0
    %205 = vmatprep.subr.mxu0 0.0
    %206 = vmatpush2.msra.mxu0 0.0
    %207 = vmatprep.subr.mxu0 0.0
    %208 = vmatpush2.msra.mxu0 0.0
    %209 = vmatprep.subr.mxu0 0.0
    %210 = vmatpush2.msra.mxu0 0.0
    %211 = vmatprep.subr.mxu0 0.0
    %212 = vmatpush2.msra.mxu0 0.0
    %213 = vmatprep.subr.mxu0 0.0
    %214 = vmatpush2.msra.mxu0 0.0
    %215 = vmatprep.subr.mxu0 0.0
    %216 = vmatpush2.msra.mxu0 0.0
    %217 = vmatprep.subr.mxu0 0.0
    %218 = vmatpush2.msra.mxu0 0.0
    %219 = vmatprep.subr.mxu0 0.0
    %220 = vmatpush2.msra.mxu0 0.0
    %221 = vmatprep.subr.mxu0 0.0
    %222 = vmatpush2.msra.mxu0 0.0
    %223 = vmatprep.subr.mxu0 0.0
    %224 = vmatpush2.msra.mxu0 0.0
    %225 = vmatprep.subr.mxu0 0.0
    %226 = vmatpush2.msra.mxu0 0.0
    %227 = vmatprep.subr.mxu0 0.0
    %228 = vmatpush2.msra.mxu0 0.0
    %229 = vmatprep.subr.mxu0 0.0
    %230 = vmatpush2.msra.mxu0 0.0
    %231 = vmatprep.mubr.f32.mxu0 0.0
    %232 = vmatmul.mubr.f32.gmra.mxu0 %v165
    %v233 = vpop.f32.mrf.mxu0
    %v234 = vadd.f32 0.0, %v233
    %v235 = vpop.f32.mrf.mxu0
    %236 = vdwg.mxu0
    %v237 = vmul.f32 %v234, %v45
    %v238 = vmul.f32 %v234, %v46
    %v239 = vmul.f32 %v234, %v47
    %v240 = vmul.f32 %v234, %v48
    %v242 = vsel %vm163, %v155, 0
    %v245 = vsel %vm163, %v237, 0
    %v248 = vsel %vm163, %v238, 0
    %v251 = vsel %vm163, %v239, 0
    %v254 = vsel %vm163, %v240, 0
    %256 = vmatprep.subr.mxu0 0.0
    %257 = vmatpush1.xpose.msra.mxu0 0.0
    %258 = vmatprep.subr.mxu0 0.0
    %259 = vmatpush1.xpose.msra.mxu0 0.0
    %260 = vmatprep.subr.mxu0 0.0
    %261 = vmatpush1.xpose.msra.mxu0 0.0
    %262 = vmatprep.subr.mxu0 0.0
    %263 = vmatpush1.xpose.msra.mxu0 0.0
    %264 = vmatprep.subr.mxu0 0.0
    %265 = vmatpush1.xpose.msra.mxu0 0.0
    %266 = vmatprep.subr.mxu0 0.0
    %267 = vmatpush1.xpose.msra.mxu0 0.0
    %268 = vmatprep.subr.mxu0 0.0
    %269 = vmatpush1.xpose.msra.mxu0 0.0
    %270 = vmatprep.subr.mxu0 0.0
    %271 = vmatpush1.xpose.msra.mxu0 0.0
    %272 = vmatprep.subr.mxu0 0.0
    %273 = vmatpush1.xpose.msra.mxu0 0.0
    %274 = vmatprep.subr.mxu0 0.0
    %275 = vmatpush1.xpose.msra.mxu0 0.0
    %276 = vmatprep.subr.mxu0 0.0
    %277 = vmatpush1.xpose.msra.mxu0 0.0
    %278 = vmatprep.subr.mxu0 0.0
    %279 = vmatpush1.xpose.msra.mxu0 0.0
    %280 = vmatprep.subr.mxu0 0.0
    %281 = vmatpush1.xpose.msra.mxu0 %v254
    %282 = vmatprep.subr.mxu0 0.0
    %283 = vmatpush1.xpose.msra.mxu0 %v251
    %284 = vmatprep.subr.mxu0 0.0
    %285 = vmatpush1.xpose.msra.mxu0 %v248
    %286 = vmatprep.subr.mxu0 0.0
    %287 = vmatpush1.xpose.msra.mxu0 %v245
    %288 = vmatprep.subr.mxu0 0.0
    %289 = vmatpush2.xpose.msra.mxu0 0.0
    %290 = vmatprep.subr.mxu0 0.0
    %291 = vmatpush2.xpose.msra.mxu0 0.0
    %292 = vmatprep.subr.mxu0 0.0
    %293 = vmatpush2.xpose.msra.mxu0 0.0
    %294 = vmatprep.subr.mxu0 0.0
    %295 = vmatpush2.xpose.msra.mxu0 0.0
    %296 = vmatprep.subr.mxu0 0.0
    %297 = vmatpush2.xpose.msra.mxu0 0.0
    %298 = vmatprep.subr.mxu0 0.0
    %299 = vmatpush2.xpose.msra.mxu0 0.0
    %300 = vmatprep.subr.mxu0 0.0
    %301 = vmatpush2.xpose.msra.mxu0 0.0
    %302 = vmatprep.subr.mxu0 0.0
    %303 = vmatpush2.xpose.msra.mxu0 0.0
    %304 = vmatprep.subr.mxu0 0.0
    %305 = vmatpush2.xpose.msra.mxu0 0.0
    %306 = vmatprep.subr.mxu0 0.0
    %307 = vmatpush2.xpose.msra.mxu0 0.0
    %308 = vmatprep.subr.mxu0 0.0
    %309 = vmatpush2.xpose.msra.mxu0 0.0
    %310 = vmatprep.subr.mxu0 0.0
    %311 = vmatpush2.xpose.msra.mxu0 0.0
    %312 = vmatprep.subr.mxu0 0.0
    %313 = vmatpush2.xpose.msra.mxu0 0.0
    %314 = vmatprep.subr.mxu0 0.0
    %315 = vmatpush2.xpose.msra.mxu0 0.0
    %316 = vmatprep.subr.mxu0 0.0
    %317 = vmatpush2.xpose.msra.mxu0 0.0
    %318 = vmatprep.subr.mxu0 0.0
    %319 = vmatpush2.xpose.msra.mxu0 0.0
    %320 = vmatprep.mubr.f32.mxu0 0.0
    %321 = vmatmul.mubr.f32.gmra.mxu0 %v242
    %v322 = vpop.f32.mrf.mxu0
    %v323 = vadd.f32 0.0, %v322
    %v324 = vpop.f32.mrf.mxu0
    %325 = vdwg.mxu0
    %v326 = vlaneseq
    %v327 = vshrl.u32 %v326, 7
    %v328 = vsub.s32 0, %v327
    %v329 = vrot.slane %v323, %v328
    %330 = vmatprep.subr.mxu0 0.0
    %331 = vmatpush1.msra.mxu0 0.0
    %332 = vmatprep.subr.mxu0 0.0
    %333 = vmatpush1.msra.mxu0 0.0
    %334 = vmatprep.subr.mxu0 0.0
    %335 = vmatpush1.msra.mxu0 0.0
    %336 = vmatprep.subr.mxu0 0.0
    %337 = vmatpush1.msra.mxu0 0.0
    %338 = vmatprep.subr.mxu0 0.0
    %339 = vmatpush1.msra.mxu0 0.0
    %340 = vmatprep.subr.mxu0 0.0
    %341 = vmatpush1.msra.mxu0 0.0
    %342 = vmatprep.subr.mxu0 0.0
    %343 = vmatpush1.msra.mxu0 0.0
    %344 = vmatprep.subr.mxu0 0.0
    %345 = vmatpush1.msra.mxu0 0.0
    %346 = vmatprep.subr.mxu0 0.0
    %347 = vmatpush1.msra.mxu0 0.0
    %348 = vmatprep.subr.mxu0 0.0
    %349 = vmatpush1.msra.mxu0 0.0
    %350 = vmatprep.subr.mxu0 0.0
    %351 = vmatpush1.msra.mxu0 0.0
    %352 = vmatprep.subr.mxu0 0.0
    %353 = vmatpush1.msra.mxu0 0.0
    %354 = vmatprep.subr.mxu0 0.0
    %355 = vmatpush1.msra.mxu0 %v142
    %356 = vmatprep.subr.mxu0 0.0
    %357 = vmatpush1.msra.mxu0 %v141
    %358 = vmatprep.subr.mxu0 0.0
    %359 = vmatpush1.msra.mxu0 %v140
    %360 = vmatprep.subr.mxu0 0.0
    %361 = vmatpush1.msra.mxu0 %v139
    %362 = vmatprep.subr.mxu0 0.0
    %363 = vmatpush2.msra.mxu0 0.0
    %364 = vmatprep.subr.mxu0 0.0
    %365 = vmatpush2.msra.mxu0 0.0
    %366 = vmatprep.subr.mxu0 0.0
    %367 = vmatpush2.msra.mxu0 0.0
    %368 = vmatprep.subr.mxu0 0.0
    %369 = vmatpush2.msra.mxu0 0.0
    %370 = vmatprep.subr.mxu0 0.0
    %371 = vmatpush2.msra.mxu0 0.0
    %372 = vmatprep.subr.mxu0 0.0
    %373 = vmatpush2.msra.mxu0 0.0
    %374 = vmatprep.subr.mxu0 0.0
    %375 = vmatpush2.msra.mxu0 0.0
    %376 = vmatprep.subr.mxu0 0.0
    %377 = vmatpush2.msra.mxu0 0.0
    %378 = vmatprep.subr.mxu0 0.0
    %379 = vmatpush2.msra.mxu0 0.0
    %380 = vmatprep.subr.mxu0 0.0
    %381 = vmatpush2.msra.mxu0 0.0
    %382 = vmatprep.subr.mxu0 0.0
    %383 = vmatpush2.msra.mxu0 0.0
    %384 = vmatprep.subr.mxu0 0.0
    %385 = vmatpush2.msra.mxu0 0.0
    %386 = vmatprep.subr.mxu0 0.0
    %387 = vmatpush2.msra.mxu0 0.0
    %388 = vmatprep.subr.mxu0 0.0
    %389 = vmatpush2.msra.mxu0 0.0
    %390 = vmatprep.subr.mxu0 0.0
    %391 = vmatpush2.msra.mxu0 0.0
    %392 = vmatprep.subr.mxu0 0.0
    %393 = vmatpush2.msra.mxu0 0.0
    %394 = vmatprep.mubr.f32.mxu0 0.0
    %395 = vmatmul.mubr.f32.gmra.mxu0 %v165
    %v396 = vpop.f32.mrf.mxu0
    %v397 = vadd.f32 %v329, %v396
    %v398 = vpop.f32.mrf.mxu0
    %399 = vdwg.mxu0
    %vm400 = vcmp.gt.f32.partialorder %v397, 0.0
    %v401 = vmul.f32 %v397, 0.2
    %v402 = vsel %vm400, %v397, %v401
    %v403 = vadd.f32 %v402, %v49
    %v404 = vsel %vm163, %v403, -inf
    %405 = vmax.xlane.f32.xlu0 %v404
    %v406 = vpop.xlane.xlu0 %405
    %v407 = vsub.f32 %v403, %v406
    %v408 = vmul.f32 %v407, 1.442695
    %v409 = vpow.pop %v408
    %v411 = vsel %vm163, %v409, 0
    %413 = vmatprep.subr.mxu0 0.0
    %414 = vmatpush1.msra.mxu0 0.0
    %415 = vmatprep.subr.mxu0 0.0
    %416 = vmatpush1.msra.mxu0 0.0
    %417 = vmatprep.subr.mxu0 0.0
    %418 = vmatpush1.msra.mxu0 0.0
    %419 = vmatprep.subr.mxu0 0.0
    %420 = vmatpush1.msra.mxu0 0.0
    %421 = vmatprep.subr.mxu0 0.0
    %422 = vmatpush1.msra.mxu0 0.0
    %423 = vmatprep.subr.mxu0 0.0
    %424 = vmatpush1.msra.mxu0 0.0
    %425 = vmatprep.subr.mxu0 0.0
    %426 = vmatpush1.msra.mxu0 0.0
    %427 = vmatprep.subr.mxu0 0.0
    %428 = vmatpush1.msra.mxu0 0.0
    %429 = vmatprep.subr.mxu0 0.0
    %430 = vmatpush1.msra.mxu0 0.0
    %431 = vmatprep.subr.mxu0 0.0
    %432 = vmatpush1.msra.mxu0 0.0
    %433 = vmatprep.subr.mxu0 0.0
    %434 = vmatpush1.msra.mxu0 0.0
    %435 = vmatprep.subr.mxu0 0.0
    %436 = vmatpush1.msra.mxu0 0.0
    %437 = vmatprep.subr.mxu0 0.0
    %438 = vmatpush1.msra.mxu0 %v240
    %439 = vmatprep.subr.mxu0 0.0
    %440 = vmatpush1.msra.mxu0 %v239
    %441 = vmatprep.subr.mxu0 0.0
    %442 = vmatpush1.msra.mxu0 %v238
    %443 = vmatprep.subr.mxu0 0.0
    %444 = vmatpush1.msra.mxu0 %v237
    %445 = vmatprep.subr.mxu0 0.0
    %446 = vmatpush2.msra.mxu0 0.0
    %447 = vmatprep.subr.mxu0 0.0
    %448 = vmatpush2.msra.mxu0 0.0
    %449 = vmatprep.subr.mxu0 0.0
    %450 = vmatpush2.msra.mxu0 0.0
    %451 = vmatprep.subr.mxu0 0.0
    %452 = vmatpush2.msra.mxu0 0.0
    %453 = vmatprep.subr.mxu0 0.0
    %454 = vmatpush2.msra.mxu0 0.0
    %455 = vmatprep.subr.mxu0 0.0
    %456 = vmatpush2.msra.mxu0 0.0
    %457 = vmatprep.subr.mxu0 0.0
    %458 = vmatpush2.msra.mxu0 0.0
    %459 = vmatprep.subr.mxu0 0.0
    %460 = vmatpush2.msra.mxu0 0.0
    %461 = vmatprep.subr.mxu0 0.0
    %462 = vmatpush2.msra.mxu0 0.0
    %463 = vmatprep.subr.mxu0 0.0
    %464 = vmatpush2.msra.mxu0 0.0
    %465 = vmatprep.subr.mxu0 0.0
    %466 = vmatpush2.msra.mxu0 0.0
    %467 = vmatprep.subr.mxu0 0.0
    %468 = vmatpush2.msra.mxu0 0.0
    %469 = vmatprep.subr.mxu0 0.0
    %470 = vmatpush2.msra.mxu0 0.0
    %471 = vmatprep.subr.mxu0 0.0
    %472 = vmatpush2.msra.mxu0 0.0
    %473 = vmatprep.subr.mxu0 0.0
    %474 = vmatpush2.msra.mxu0 0.0
    %475 = vmatprep.subr.mxu0 0.0
    %476 = vmatpush2.msra.mxu0 0.0
    %477 = vmatprep.mubr.f32.mxu0 0.0
    %478 = vmatmul.mubr.f32.gmra.mxu0 %v411
    %v479 = vpop.f32.mrf.mxu0
    %v480 = vadd.f32 0.0, %v479
    %v481 = vpop.f32.mrf.mxu0
    %482 = vdwg.mxu0
    %483 = vmatprep.subr.mxu0 0.0
    %484 = vmatpush1.msra.mxu0 0.0
    %485 = vmatprep.subr.mxu0 0.0
    %486 = vmatpush1.msra.mxu0 0.0
    %487 = vmatprep.subr.mxu0 0.0
    %488 = vmatpush1.msra.mxu0 0.0
    %489 = vmatprep.subr.mxu0 0.0
    %490 = vmatpush1.msra.mxu0 0.0
    %491 = vmatprep.subr.mxu0 0.0
    %492 = vmatpush1.msra.mxu0 0.0
    %493 = vmatprep.subr.mxu0 0.0
    %494 = vmatpush1.msra.mxu0 0.0
    %495 = vmatprep.subr.mxu0 0.0
    %496 = vmatpush1.msra.mxu0 0.0
    %497 = vmatprep.subr.mxu0 0.0
    %498 = vmatpush1.msra.mxu0 0.0
    %499 = vmatprep.subr.mxu0 0.0
    %500 = vmatpush1.msra.mxu0 0.0
    %501 = vmatprep.subr.mxu0 0.0
    %502 = vmatpush1.msra.mxu0 0.0
    %503 = vmatprep.subr.mxu0 0.0
    %504 = vmatpush1.msra.mxu0 0.0
    %505 = vmatprep.subr.mxu0 0.0
    %506 = vmatpush1.msra.mxu0 0.0
    %507 = vmatprep.subr.mxu0 0.0
    %508 = vmatpush1.msra.mxu0 %v48
    %509 = vmatprep.subr.mxu0 0.0
    %510 = vmatpush1.msra.mxu0 %v47
    %511 = vmatprep.subr.mxu0 0.0
    %512 = vmatpush1.msra.mxu0 %v46
    %513 = vmatprep.subr.mxu0 0.0
    %514 = vmatpush1.msra.mxu0 %v45
    %515 = vmatprep.subr.mxu0 0.0
    %516 = vmatpush2.msra.mxu0 0.0
    %517 = vmatprep.subr.mxu0 0.0
    %518 = vmatpush2.msra.mxu0 0.0
    %519 = vmatprep.subr.mxu0 0.0
    %520 = vmatpush2.msra.mxu0 0.0
    %521 = vmatprep.subr.mxu0 0.0
    %522 = vmatpush2.msra.mxu0 0.0
    %523 = vmatprep.subr.mxu0 0.0
    %524 = vmatpush2.msra.mxu0 0.0
    %525 = vmatprep.subr.mxu0 0.0
    %526 = vmatpush2.msra.mxu0 0.0
    %527 = vmatprep.subr.mxu0 0.0
    %528 = vmatpush2.msra.mxu0 0.0
    %529 = vmatprep.subr.mxu0 0.0
    %530 = vmatpush2.msra.mxu0 0.0
    %531 = vmatprep.subr.mxu0 0.0
    %532 = vmatpush2.msra.mxu0 0.0
    %533 = vmatprep.subr.mxu0 0.0
    %534 = vmatpush2.msra.mxu0 0.0
    %535 = vmatprep.subr.mxu0 0.0
    %536 = vmatpush2.msra.mxu0 0.0
    %537 = vmatprep.subr.mxu0 0.0
    %538 = vmatpush2.msra.mxu0 0.0
    %539 = vmatprep.subr.mxu0 0.0
    %540 = vmatpush2.msra.mxu0 0.0
    %541 = vmatprep.subr.mxu0 0.0
    %542 = vmatpush2.msra.mxu0 0.0
    %543 = vmatprep.subr.mxu0 0.0
    %544 = vmatpush2.msra.mxu0 0.0
    %545 = vmatprep.subr.mxu0 0.0
    %546 = vmatpush2.msra.mxu0 0.0
    %547 = vmatprep.mubr.f32.mxu0 0.0
    %548 = vmatmul.mubr.f32.gmra.mxu0 %v411
    %v549 = vpop.f32.mrf.mxu0
    %v550 = vadd.f32 0.0, %v549
    %v551 = vpop.f32.mrf.mxu0
    %552 = vdwg.mxu0
    %v553 = vrcp.pop %v550
    %v554 = vmul.f32 %v480, %v553
    %v555 = vadd.f32 %v132, %v554
    %v556 = vlaneseq
    %v557 = vshrl.u32 %v556, 7
    %v558 = vsub.s32 0, %v557
    %v559 = vrot.slane %v156, %v558
    %v560 = vadd.f32 %v555, %v559
    %v561 = vsel %vm163, %v560, 0.0
    %v562 = vrot.slane %v561, 4
    %v563 = vadd.f32 %v561, %v562
    %v564 = vrot.slane %v563, 2
    %v565 = vadd.f32 %v563, %v564
    %v566 = vrot.slane %v565, 1
    %v567 = vadd.f32 %v565, %v566
    %v568 = vrcp.pop 8.0
    %v569 = vmul.f32 %v567, %v568
    %v570 = vmul.f32 %v560, %v560
    %v571 = vsel %vm163, %v570, 0.0
    %v572 = vrot.slane %v571, 4
    %v573 = vadd.f32 %v571, %v572
    %v574 = vrot.slane %v573, 2
    %v575 = vadd.f32 %v573, %v574
    %v576 = vrot.slane %v575, 1
    %v577 = vadd.f32 %v575, %v576
    %v578 = vmul.f32 %v577, %v568
    %v579 = vmul.f32 %v569, %v569
    %v580 = vsub.f32 %v578, %v579
    %v581 = vmax.f32 %v580, 0.0
    %v582 = vsub.f32 %v560, %v569
    %v583 = vadd.f32 %v581, 1e-05
    %v584 = vrsqrt.pop %v583
    %v585 = vmul.f32 %v582, %v584
    %v586 = vlaneseq
    %v587 = vshrl.u32 %v586, 7
    %v588 = vsub.s32 0, %v587
    %v589 = vrot.slane %v157, %v588
    %v590 = vmul.f32 %v585, %v589
    %v591 = vlaneseq
    %v592 = vshrl.u32 %v591, 7
    %v593 = vsub.s32 0, %v592
    %v594 = vrot.slane %v158, %v593
    %v595 = vadd.f32 %v590, %v594
    %v596 = vlaneseq
    %v597 = vshrl.u32 %v596, 7
    %v598 = vsub.s32 0, %v597
    %v599 = vrot.slane %v159, %v598
    %v601 = vsel %vm163, %v595, 0
    %603 = vmatprep.subr.mxu0 0.0
    %604 = vmatpush1.msra.mxu0 0.0
    %605 = vmatprep.subr.mxu0 0.0
    %606 = vmatpush1.msra.mxu0 0.0
    %607 = vmatprep.subr.mxu0 0.0
    %608 = vmatpush1.msra.mxu0 0.0
    %609 = vmatprep.subr.mxu0 0.0
    %610 = vmatpush1.msra.mxu0 0.0
    %611 = vmatprep.subr.mxu0 0.0
    %612 = vmatpush1.msra.mxu0 0.0
    %613 = vmatprep.subr.mxu0 0.0
    %614 = vmatpush1.msra.mxu0 0.0
    %615 = vmatprep.subr.mxu0 0.0
    %616 = vmatpush1.msra.mxu0 0.0
    %617 = vmatprep.subr.mxu0 0.0
    %618 = vmatpush1.msra.mxu0 0.0
    %619 = vmatprep.subr.mxu0 0.0
    %620 = vmatpush1.msra.mxu0 0.0
    %621 = vmatprep.subr.mxu0 0.0
    %622 = vmatpush1.msra.mxu0 0.0
    %623 = vmatprep.subr.mxu0 0.0
    %624 = vmatpush1.msra.mxu0 0.0
    %625 = vmatprep.subr.mxu0 0.0
    %626 = vmatpush1.msra.mxu0 0.0
    %627 = vmatprep.subr.mxu0 0.0
    %628 = vmatpush1.msra.mxu0 %v146
    %629 = vmatprep.subr.mxu0 0.0
    %630 = vmatpush1.msra.mxu0 %v145
    %631 = vmatprep.subr.mxu0 0.0
    %632 = vmatpush1.msra.mxu0 %v144
    %633 = vmatprep.subr.mxu0 0.0
    %634 = vmatpush1.msra.mxu0 %v143
    %635 = vmatprep.subr.mxu0 0.0
    %636 = vmatpush2.msra.mxu0 0.0
    %637 = vmatprep.subr.mxu0 0.0
    %638 = vmatpush2.msra.mxu0 0.0
    %639 = vmatprep.subr.mxu0 0.0
    %640 = vmatpush2.msra.mxu0 0.0
    %641 = vmatprep.subr.mxu0 0.0
    %642 = vmatpush2.msra.mxu0 0.0
    %643 = vmatprep.subr.mxu0 0.0
    %644 = vmatpush2.msra.mxu0 0.0
    %645 = vmatprep.subr.mxu0 0.0
    %646 = vmatpush2.msra.mxu0 0.0
    %647 = vmatprep.subr.mxu0 0.0
    %648 = vmatpush2.msra.mxu0 0.0
    %649 = vmatprep.subr.mxu0 0.0
    %650 = vmatpush2.msra.mxu0 0.0
    %651 = vmatprep.subr.mxu0 0.0
    %652 = vmatpush2.msra.mxu0 0.0
    %653 = vmatprep.subr.mxu0 0.0
    %654 = vmatpush2.msra.mxu0 0.0
    %655 = vmatprep.subr.mxu0 0.0
    %656 = vmatpush2.msra.mxu0 0.0
    %657 = vmatprep.subr.mxu0 0.0
    %658 = vmatpush2.msra.mxu0 0.0
    %659 = vmatprep.subr.mxu0 0.0
    %660 = vmatpush2.msra.mxu0 0.0
    %661 = vmatprep.subr.mxu0 0.0
    %662 = vmatpush2.msra.mxu0 0.0
    %663 = vmatprep.subr.mxu0 0.0
    %664 = vmatpush2.msra.mxu0 0.0
    %665 = vmatprep.subr.mxu0 0.0
    %666 = vmatpush2.msra.mxu0 0.0
    %667 = vmatprep.mubr.f32.mxu0 0.0
    %668 = vmatmul.mubr.f32.gmra.mxu0 %v601
    %v669 = vpop.f32.mrf.mxu0
    %v670 = vadd.f32 %v599, %v669
    %v671 = vpop.f32.mrf.mxu0
    %672 = vdwg.mxu0
    %v673 = vmax.f32 %v670, 0.0
    %v674 = vlaneseq
    %v675 = vshrl.u32 %v674, 7
    %v676 = vsub.s32 0, %v675
    %v677 = vrot.slane %v160, %v676
    %vm678 = vcmask 523264
    %v680 = vsel %vm678, %v673, 0
    %682 = vmatprep.subr.mxu0 0.0
    %683 = vmatpush1.msra.mxu0 0.0
    %684 = vmatprep.subr.mxu0 0.0
    %685 = vmatpush1.msra.mxu0 0.0
    %686 = vmatprep.subr.mxu0 0.0
    %687 = vmatpush1.msra.mxu0 0.0
    %688 = vmatprep.subr.mxu0 0.0
    %689 = vmatpush1.msra.mxu0 0.0
    %690 = vmatprep.subr.mxu0 0.0
    %691 = vmatpush1.msra.mxu0 0.0
    %692 = vmatprep.subr.mxu0 0.0
    %693 = vmatpush1.msra.mxu0 0.0
    %694 = vmatprep.subr.mxu0 0.0
    %695 = vmatpush1.msra.mxu0 0.0
    %696 = vmatprep.subr.mxu0 0.0
    %697 = vmatpush1.msra.mxu0 0.0
    %698 = vmatprep.subr.mxu0 0.0
    %699 = vmatpush1.msra.mxu0 %v154
    %700 = vmatprep.subr.mxu0 0.0
    %701 = vmatpush1.msra.mxu0 %v153
    %702 = vmatprep.subr.mxu0 0.0
    %703 = vmatpush1.msra.mxu0 %v152
    %704 = vmatprep.subr.mxu0 0.0
    %705 = vmatpush1.msra.mxu0 %v151
    %706 = vmatprep.subr.mxu0 0.0
    %707 = vmatpush1.msra.mxu0 %v150
    %708 = vmatprep.subr.mxu0 0.0
    %709 = vmatpush1.msra.mxu0 %v149
    %710 = vmatprep.subr.mxu0 0.0
    %711 = vmatpush1.msra.mxu0 %v148
    %712 = vmatprep.subr.mxu0 0.0
    %713 = vmatpush1.msra.mxu0 %v147
    %714 = vmatprep.subr.mxu0 0.0
    %715 = vmatpush2.msra.mxu0 0.0
    %716 = vmatprep.subr.mxu0 0.0
    %717 = vmatpush2.msra.mxu0 0.0
    %718 = vmatprep.subr.mxu0 0.0
    %719 = vmatpush2.msra.mxu0 0.0
    %720 = vmatprep.subr.mxu0 0.0
    %721 = vmatpush2.msra.mxu0 0.0
    %722 = vmatprep.subr.mxu0 0.0
    %723 = vmatpush2.msra.mxu0 0.0
    %724 = vmatprep.subr.mxu0 0.0
    %725 = vmatpush2.msra.mxu0 0.0
    %726 = vmatprep.subr.mxu0 0.0
    %727 = vmatpush2.msra.mxu0 0.0
    %728 = vmatprep.subr.mxu0 0.0
    %729 = vmatpush2.msra.mxu0 0.0
    %730 = vmatprep.subr.mxu0 0.0
    %731 = vmatpush2.msra.mxu0 0.0
    %732 = vmatprep.subr.mxu0 0.0
    %733 = vmatpush2.msra.mxu0 0.0
    %734 = vmatprep.subr.mxu0 0.0
    %735 = vmatpush2.msra.mxu0 0.0
    %736 = vmatprep.subr.mxu0 0.0
    %737 = vmatpush2.msra.mxu0 0.0
    %738 = vmatprep.subr.mxu0 0.0
    %739 = vmatpush2.msra.mxu0 0.0
    %740 = vmatprep.subr.mxu0 0.0
    %741 = vmatpush2.msra.mxu0 0.0
    %742 = vmatprep.subr.mxu0 0.0
    %743 = vmatpush2.msra.mxu0 0.0
    %744 = vmatprep.subr.mxu0 0.0
    %745 = vmatpush2.msra.mxu0 0.0
    %746 = vmatprep.mubr.f32.mxu0 0.0
    %747 = vmatmul.mubr.f32.gmra.mxu0 %v680
    %v748 = vpop.f32.mrf.mxu0
    %v749 = vadd.f32 %v677, %v748
    %v750 = vpop.f32.mrf.mxu0
    %751 = vdwg.mxu0
    %v752 = vadd.f32 %v595, %v749
    %v753 = vsel %vm163, %v752, 0.0
    %v754 = vrot.slane %v753, 4
    %v755 = vadd.f32 %v753, %v754
    %v756 = vrot.slane %v755, 2
    %v757 = vadd.f32 %v755, %v756
    %v758 = vrot.slane %v757, 1
    %v759 = vadd.f32 %v757, %v758
    %v760 = vmul.f32 %v759, %v568
    %v761 = vmul.f32 %v752, %v752
    %v762 = vsel %vm163, %v761, 0.0
    %v763 = vrot.slane %v762, 4
    %v764 = vadd.f32 %v762, %v763
    %v765 = vrot.slane %v764, 2
    %v766 = vadd.f32 %v764, %v765
    %v767 = vrot.slane %v766, 1
    %v768 = vadd.f32 %v766, %v767
    %v769 = vmul.f32 %v768, %v568
    %v770 = vmul.f32 %v760, %v760
    %v771 = vsub.f32 %v769, %v770
    %v772 = vmax.f32 %v771, 0.0
    %v773 = vsub.f32 %v752, %v760
    %v774 = vadd.f32 %v772, 1e-05
    %v775 = vrsqrt.pop %v774
    %v776 = vmul.f32 %v773, %v775
    %v777 = vlaneseq
    %v778 = vshrl.u32 %v777, 7
    %v779 = vsub.s32 0, %v778
    %v780 = vrot.slane %v161, %v779
    %v781 = vmul.f32 %v776, %v780
    %v782 = vlaneseq
    %v783 = vshrl.u32 %v782, 7
    %v784 = vsub.s32 0, %v783
    %v785 = vrot.slane %v162, %v784
    %v786 = vadd.f32 %v781, %v785
    %v787 = vld [vmem:[#allocation2 + $0xa8] sm:$0xff]
    %v788 = vld [vmem:[#allocation2 + $0xb0] sm:$0xff]
    %v789 = vld [vmem:[#allocation2 + $0xb8] sm:$0xff]
    %v790 = vld [vmem:[#allocation2 + $0xc0] sm:$0xff]
    %v791 = vld [vmem:[#allocation2 + $0xc8] sm:$0xff]
    %v792 = vld [vmem:[#allocation2 + $0xd0] sm:$0xff]
    %v793 = vld [vmem:[#allocation2 + $0xd8] sm:$0xff]
    %v794 = vld [vmem:[#allocation2 + $0xe0] sm:$0xff]
    %v795 = vld [vmem:[#allocation2 + $0xe8] sm:$0xff]
    %v796 = vld [vmem:[#allocation2 + $0xf0] sm:$0xff]
    %v797 = vld [vmem:[#allocation2 + $0xf8] sm:$0xff]
    %v798 = vld [vmem:[#allocation2 + $0x100] sm:$0xff]
    %v799 = vld [vmem:[#allocation2 + $0x108] sm:$0xff]
    %v800 = vld [vmem:[#allocation2 + $0x110] sm:$0xff]
    %v801 = vld [vmem:[#allocation2 + $0x118] sm:$0xff]
    %v802 = vld [vmem:[#allocation2 + $0x120] sm:$0xff]
    %v803 = vld [vmem:[#allocation2 + $0x128] sm:$0xff]
    %v804 = vld [vmem:[#allocation2 + $0x130] sm:$0xff]
    %v805 = vld [vmem:[#allocation2 + $0x138] sm:$0xff]
    %v806 = vld [vmem:[#allocation2 + $0x140] sm:$0xff]
    %v807 = vld [vmem:[#allocation4 + $0x9] sm:$0x1]
    %v808 = vld [vmem:[#allocation4 + $0xa] sm:$0x1]
    %v809 = vld [vmem:[#allocation4 + $0xb] sm:$0x1]
    %v810 = vld [vmem:[#allocation4 + $0xc] sm:$0x1]
    %v811 = vld [vmem:[#allocation4 + $0xd] sm:$0x1]
    %v812 = vld [vmem:[#allocation4 + $0xe] sm:$0x1]
    %v813 = vld [vmem:[#allocation4 + $0xf] sm:$0x1]
    %v814 = vld [vmem:[#allocation4 + $0x10] sm:$0x1]
    %v816 = vsel %vm163, %v786, 0
    %818 = vmatprep.subr.mxu0 0.0
    %819 = vmatpush1.msra.mxu0 0.0
    %820 = vmatprep.subr.mxu0 0.0
    %821 = vmatpush1.msra.mxu0 0.0
    %822 = vmatprep.subr.mxu0 0.0
    %823 = vmatpush1.msra.mxu0 0.0
    %824 = vmatprep.subr.mxu0 0.0
    %825 = vmatpush1.msra.mxu0 0.0
    %826 = vmatprep.subr.mxu0 0.0
    %827 = vmatpush1.msra.mxu0 0.0
    %828 = vmatprep.subr.mxu0 0.0
    %829 = vmatpush1.msra.mxu0 0.0
    %830 = vmatprep.subr.mxu0 0.0
    %831 = vmatpush1.msra.mxu0 0.0
    %832 = vmatprep.subr.mxu0 0.0
    %833 = vmatpush1.msra.mxu0 0.0
    %834 = vmatprep.subr.mxu0 0.0
    %835 = vmatpush1.msra.mxu0 0.0
    %836 = vmatprep.subr.mxu0 0.0
    %837 = vmatpush1.msra.mxu0 0.0
    %838 = vmatprep.subr.mxu0 0.0
    %839 = vmatpush1.msra.mxu0 0.0
    %840 = vmatprep.subr.mxu0 0.0
    %841 = vmatpush1.msra.mxu0 0.0
    %842 = vmatprep.subr.mxu0 0.0
    %843 = vmatpush1.msra.mxu0 %v790
    %844 = vmatprep.subr.mxu0 0.0
    %845 = vmatpush1.msra.mxu0 %v789
    %846 = vmatprep.subr.mxu0 0.0
    %847 = vmatpush1.msra.mxu0 %v788
    %848 = vmatprep.subr.mxu0 0.0
    %849 = vmatpush1.msra.mxu0 %v787
    %850 = vmatprep.subr.mxu0 0.0
    %851 = vmatpush2.msra.mxu0 0.0
    %852 = vmatprep.subr.mxu0 0.0
    %853 = vmatpush2.msra.mxu0 0.0
    %854 = vmatprep.subr.mxu0 0.0
    %855 = vmatpush2.msra.mxu0 0.0
    %856 = vmatprep.subr.mxu0 0.0
    %857 = vmatpush2.msra.mxu0 0.0
    %858 = vmatprep.subr.mxu0 0.0
    %859 = vmatpush2.msra.mxu0 0.0
    %860 = vmatprep.subr.mxu0 0.0
    %861 = vmatpush2.msra.mxu0 0.0
    %862 = vmatprep.subr.mxu0 0.0
    %863 = vmatpush2.msra.mxu0 0.0
    %864 = vmatprep.subr.mxu0 0.0
    %865 = vmatpush2.msra.mxu0 0.0
    %866 = vmatprep.subr.mxu0 0.0
    %867 = vmatpush2.msra.mxu0 0.0
    %868 = vmatprep.subr.mxu0 0.0
    %869 = vmatpush2.msra.mxu0 0.0
    %870 = vmatprep.subr.mxu0 0.0
    %871 = vmatpush2.msra.mxu0 0.0
    %872 = vmatprep.subr.mxu0 0.0
    %873 = vmatpush2.msra.mxu0 0.0
    %874 = vmatprep.subr.mxu0 0.0
    %875 = vmatpush2.msra.mxu0 0.0
    %876 = vmatprep.subr.mxu0 0.0
    %877 = vmatpush2.msra.mxu0 0.0
    %878 = vmatprep.subr.mxu0 0.0
    %879 = vmatpush2.msra.mxu0 0.0
    %880 = vmatprep.subr.mxu0 0.0
    %881 = vmatpush2.msra.mxu0 0.0
    %882 = vmatprep.mubr.f32.mxu0 0.0
    %883 = vmatmul.mubr.f32.gmra.mxu0 %v816
    %v884 = vpop.f32.mrf.mxu0
    %v885 = vadd.f32 0.0, %v884
    %v886 = vpop.f32.mrf.mxu0
    %887 = vdwg.mxu0
    %v888 = vmul.f32 %v885, %v45
    %v889 = vmul.f32 %v885, %v46
    %v890 = vmul.f32 %v885, %v47
    %v891 = vmul.f32 %v885, %v48
    %v893 = vsel %vm163, %v807, 0
    %v896 = vsel %vm163, %v888, 0
    %v899 = vsel %vm163, %v889, 0
    %v902 = vsel %vm163, %v890, 0
    %v905 = vsel %vm163, %v891, 0
    %907 = vmatprep.subr.mxu0 0.0
    %908 = vmatpush1.xpose.msra.mxu0 0.0
    %909 = vmatprep.subr.mxu0 0.0
    %910 = vmatpush1.xpose.msra.mxu0 0.0
    %911 = vmatprep.subr.mxu0 0.0
    %912 = vmatpush1.xpose.msra.mxu0 0.0
    %913 = vmatprep.subr.mxu0 0.0
    %914 = vmatpush1.xpose.msra.mxu0 0.0
    %915 = vmatprep.subr.mxu0 0.0
    %916 = vmatpush1.xpose.msra.mxu0 0.0
    %917 = vmatprep.subr.mxu0 0.0
    %918 = vmatpush1.xpose.msra.mxu0 0.0
    %919 = vmatprep.subr.mxu0 0.0
    %920 = vmatpush1.xpose.msra.mxu0 0.0
    %921 = vmatprep.subr.mxu0 0.0
    %922 = vmatpush1.xpose.msra.mxu0 0.0
    %923 = vmatprep.subr.mxu0 0.0
    %924 = vmatpush1.xpose.msra.mxu0 0.0
    %925 = vmatprep.subr.mxu0 0.0
    %926 = vmatpush1.xpose.msra.mxu0 0.0
    %927 = vmatprep.subr.mxu0 0.0
    %928 = vmatpush1.xpose.msra.mxu0 0.0
    %929 = vmatprep.subr.mxu0 0.0
    %930 = vmatpush1.xpose.msra.mxu0 0.0
    %931 = vmatprep.subr.mxu0 0.0
    %932 = vmatpush1.xpose.msra.mxu0 %v905
    %933 = vmatprep.subr.mxu0 0.0
    %934 = vmatpush1.xpose.msra.mxu0 %v902
    %935 = vmatprep.subr.mxu0 0.0
    %936 = vmatpush1.xpose.msra.mxu0 %v899
    %937 = vmatprep.subr.mxu0 0.0
    %938 = vmatpush1.xpose.msra.mxu0 %v896
    %939 = vmatprep.subr.mxu0 0.0
    %940 = vmatpush2.xpose.msra.mxu0 0.0
    %941 = vmatprep.subr.mxu0 0.0
    %942 = vmatpush2.xpose.msra.mxu0 0.0
    %943 = vmatprep.subr.mxu0 0.0
    %944 = vmatpush2.xpose.msra.mxu0 0.0
    %945 = vmatprep.subr.mxu0 0.0
    %946 = vmatpush2.xpose.msra.mxu0 0.0
    %947 = vmatprep.subr.mxu0 0.0
    %948 = vmatpush2.xpose.msra.mxu0 0.0
    %949 = vmatprep.subr.mxu0 0.0
    %950 = vmatpush2.xpose.msra.mxu0 0.0
    %951 = vmatprep.subr.mxu0 0.0
    %952 = vmatpush2.xpose.msra.mxu0 0.0
    %953 = vmatprep.subr.mxu0 0.0
    %954 = vmatpush2.xpose.msra.mxu0 0.0
    %955 = vmatprep.subr.mxu0 0.0
    %956 = vmatpush2.xpose.msra.mxu0 0.0
    %957 = vmatprep.subr.mxu0 0.0
    %958 = vmatpush2.xpose.msra.mxu0 0.0
    %959 = vmatprep.subr.mxu0 0.0
    %960 = vmatpush2.xpose.msra.mxu0 0.0
    %961 = vmatprep.subr.mxu0 0.0
    %962 = vmatpush2.xpose.msra.mxu0 0.0
    %963 = vmatprep.subr.mxu0 0.0
    %964 = vmatpush2.xpose.msra.mxu0 0.0
    %965 = vmatprep.subr.mxu0 0.0
    %966 = vmatpush2.xpose.msra.mxu0 0.0
    %967 = vmatprep.subr.mxu0 0.0
    %968 = vmatpush2.xpose.msra.mxu0 0.0
    %969 = vmatprep.subr.mxu0 0.0
    %970 = vmatpush2.xpose.msra.mxu0 0.0
    %971 = vmatprep.mubr.f32.mxu0 0.0
    %972 = vmatmul.mubr.f32.gmra.mxu0 %v893
    %v973 = vpop.f32.mrf.mxu0
    %v974 = vadd.f32 0.0, %v973
    %v975 = vpop.f32.mrf.mxu0
    %976 = vdwg.mxu0
    %v977 = vlaneseq
    %v978 = vshrl.u32 %v977, 7
    %v979 = vsub.s32 0, %v978
    %v980 = vrot.slane %v974, %v979
    %981 = vmatprep.subr.mxu0 0.0
    %982 = vmatpush1.msra.mxu0 0.0
    %983 = vmatprep.subr.mxu0 0.0
    %984 = vmatpush1.msra.mxu0 0.0
    %985 = vmatprep.subr.mxu0 0.0
    %986 = vmatpush1.msra.mxu0 0.0
    %987 = vmatprep.subr.mxu0 0.0
    %988 = vmatpush1.msra.mxu0 0.0
    %989 = vmatprep.subr.mxu0 0.0
    %990 = vmatpush1.msra.mxu0 0.0
    %991 = vmatprep.subr.mxu0 0.0
    %992 = vmatpush1.msra.mxu0 0.0
    %993 = vmatprep.subr.mxu0 0.0
    %994 = vmatpush1.msra.mxu0 0.0
    %995 = vmatprep.subr.mxu0 0.0
    %996 = vmatpush1.msra.mxu0 0.0
    %997 = vmatprep.subr.mxu0 0.0
    %998 = vmatpush1.msra.mxu0 0.0
    %999 = vmatprep.subr.mxu0 0.0
    %1000 = vmatpush1.msra.mxu0 0.0
    %1001 = vmatprep.subr.mxu0 0.0
    %1002 = vmatpush1.msra.mxu0 0.0
    %1003 = vmatprep.subr.mxu0 0.0
    %1004 = vmatpush1.msra.mxu0 0.0
    %1005 = vmatprep.subr.mxu0 0.0
    %1006 = vmatpush1.msra.mxu0 %v794
    %1007 = vmatprep.subr.mxu0 0.0
    %1008 = vmatpush1.msra.mxu0 %v793
    %1009 = vmatprep.subr.mxu0 0.0
    %1010 = vmatpush1.msra.mxu0 %v792
    %1011 = vmatprep.subr.mxu0 0.0
    %1012 = vmatpush1.msra.mxu0 %v791
    %1013 = vmatprep.subr.mxu0 0.0
    %1014 = vmatpush2.msra.mxu0 0.0
    %1015 = vmatprep.subr.mxu0 0.0
    %1016 = vmatpush2.msra.mxu0 0.0
    %1017 = vmatprep.subr.mxu0 0.0
    %1018 = vmatpush2.msra.mxu0 0.0
    %1019 = vmatprep.subr.mxu0 0.0
    %1020 = vmatpush2.msra.mxu0 0.0
    %1021 = vmatprep.subr.mxu0 0.0
    %1022 = vmatpush2.msra.mxu0 0.0
    %1023 = vmatprep.subr.mxu0 0.0
    %1024 = vmatpush2.msra.mxu0 0.0
    %1025 = vmatprep.subr.mxu0 0.0
    %1026 = vmatpush2.msra.mxu0 0.0
    %1027 = vmatprep.subr.mxu0 0.0
    %1028 = vmatpush2.msra.mxu0 0.0
    %1029 = vmatprep.subr.mxu0 0.0
    %1030 = vmatpush2.msra.mxu0 0.0
    %1031 = vmatprep.subr.mxu0 0.0
    %1032 = vmatpush2.msra.mxu0 0.0
    %1033 = vmatprep.subr.mxu0 0.0
    %1034 = vmatpush2.msra.mxu0 0.0
    %1035 = vmatprep.subr.mxu0 0.0
    %1036 = vmatpush2.msra.mxu0 0.0
    %1037 = vmatprep.subr.mxu0 0.0
    %1038 = vmatpush2.msra.mxu0 0.0
    %1039 = vmatprep.subr.mxu0 0.0
    %1040 = vmatpush2.msra.mxu0 0.0
    %1041 = vmatprep.subr.mxu0 0.0
    %1042 = vmatpush2.msra.mxu0 0.0
    %1043 = vmatprep.subr.mxu0 0.0
    %1044 = vmatpush2.msra.mxu0 0.0
    %1045 = vmatprep.mubr.f32.mxu0 0.0
    %1046 = vmatmul.mubr.f32.gmra.mxu0 %v816
    %v1047 = vpop.f32.mrf.mxu0
    %v1048 = vadd.f32 %v980, %v1047
    %v1049 = vpop.f32.mrf.mxu0
    %1050 = vdwg.mxu0
    %vm1051 = vcmp.gt.f32.partialorder %v1048, 0.0
    %v1052 = vmul.f32 %v1048, 0.2
    %v1053 = vsel %vm1051, %v1048, %v1052
    %v1054 = vadd.f32 %v1053, %v49
    %v1055 = vsel %vm163, %v1054, -inf
    %1056 = vmax.xlane.f32.xlu0 %v1055
    %v1057 = vpop.xlane.xlu0 %1056
    %v1058 = vsub.f32 %v1054, %v1057
    %v1059 = vmul.f32 %v1058, 1.442695
    %v1060 = vpow.pop %v1059
    %v1062 = vsel %vm163, %v1060, 0
    %1064 = vmatprep.subr.mxu0 0.0
    %1065 = vmatpush1.msra.mxu0 0.0
    %1066 = vmatprep.subr.mxu0 0.0
    %1067 = vmatpush1.msra.mxu0 0.0
    %1068 = vmatprep.subr.mxu0 0.0
    %1069 = vmatpush1.msra.mxu0 0.0
    %1070 = vmatprep.subr.mxu0 0.0
    %1071 = vmatpush1.msra.mxu0 0.0
    %1072 = vmatprep.subr.mxu0 0.0
    %1073 = vmatpush1.msra.mxu0 0.0
    %1074 = vmatprep.subr.mxu0 0.0
    %1075 = vmatpush1.msra.mxu0 0.0
    %1076 = vmatprep.subr.mxu0 0.0
    %1077 = vmatpush1.msra.mxu0 0.0
    %1078 = vmatprep.subr.mxu0 0.0
    %1079 = vmatpush1.msra.mxu0 0.0
    %1080 = vmatprep.subr.mxu0 0.0
    %1081 = vmatpush1.msra.mxu0 0.0
    %1082 = vmatprep.subr.mxu0 0.0
    %1083 = vmatpush1.msra.mxu0 0.0
    %1084 = vmatprep.subr.mxu0 0.0
    %1085 = vmatpush1.msra.mxu0 0.0
    %1086 = vmatprep.subr.mxu0 0.0
    %1087 = vmatpush1.msra.mxu0 0.0
    %1088 = vmatprep.subr.mxu0 0.0
    %1089 = vmatpush1.msra.mxu0 %v891
    %1090 = vmatprep.subr.mxu0 0.0
    %1091 = vmatpush1.msra.mxu0 %v890
    %1092 = vmatprep.subr.mxu0 0.0
    %1093 = vmatpush1.msra.mxu0 %v889
    %1094 = vmatprep.subr.mxu0 0.0
    %1095 = vmatpush1.msra.mxu0 %v888
    %1096 = vmatprep.subr.mxu0 0.0
    %1097 = vmatpush2.msra.mxu0 0.0
    %1098 = vmatprep.subr.mxu0 0.0
    %1099 = vmatpush2.msra.mxu0 0.0
    %1100 = vmatprep.subr.mxu0 0.0
    %1101 = vmatpush2.msra.mxu0 0.0
    %1102 = vmatprep.subr.mxu0 0.0
    %1103 = vmatpush2.msra.mxu0 0.0
    %1104 = vmatprep.subr.mxu0 0.0
    %1105 = vmatpush2.msra.mxu0 0.0
    %1106 = vmatprep.subr.mxu0 0.0
    %1107 = vmatpush2.msra.mxu0 0.0
    %1108 = vmatprep.subr.mxu0 0.0
    %1109 = vmatpush2.msra.mxu0 0.0
    %1110 = vmatprep.subr.mxu0 0.0
    %1111 = vmatpush2.msra.mxu0 0.0
    %1112 = vmatprep.subr.mxu0 0.0
    %1113 = vmatpush2.msra.mxu0 0.0
    %1114 = vmatprep.subr.mxu0 0.0
    %1115 = vmatpush2.msra.mxu0 0.0
    %1116 = vmatprep.subr.mxu0 0.0
    %1117 = vmatpush2.msra.mxu0 0.0
    %1118 = vmatprep.subr.mxu0 0.0
    %1119 = vmatpush2.msra.mxu0 0.0
    %1120 = vmatprep.subr.mxu0 0.0
    %1121 = vmatpush2.msra.mxu0 0.0
    %1122 = vmatprep.subr.mxu0 0.0
    %1123 = vmatpush2.msra.mxu0 0.0
    %1124 = vmatprep.subr.mxu0 0.0
    %1125 = vmatpush2.msra.mxu0 0.0
    %1126 = vmatprep.subr.mxu0 0.0
    %1127 = vmatpush2.msra.mxu0 0.0
    %1128 = vmatprep.mubr.f32.mxu0 0.0
    %1129 = vmatmul.mubr.f32.gmra.mxu0 %v1062
    %v1130 = vpop.f32.mrf.mxu0
    %v1131 = vadd.f32 0.0, %v1130
    %v1132 = vpop.f32.mrf.mxu0
    %1133 = vdwg.mxu0
    %1134 = vmatprep.subr.mxu0 0.0
    %1135 = vmatpush1.msra.mxu0 0.0
    %1136 = vmatprep.subr.mxu0 0.0
    %1137 = vmatpush1.msra.mxu0 0.0
    %1138 = vmatprep.subr.mxu0 0.0
    %1139 = vmatpush1.msra.mxu0 0.0
    %1140 = vmatprep.subr.mxu0 0.0
    %1141 = vmatpush1.msra.mxu0 0.0
    %1142 = vmatprep.subr.mxu0 0.0
    %1143 = vmatpush1.msra.mxu0 0.0
    %1144 = vmatprep.subr.mxu0 0.0
    %1145 = vmatpush1.msra.mxu0 0.0
    %1146 = vmatprep.subr.mxu0 0.0
    %1147 = vmatpush1.msra.mxu0 0.0
    %1148 = vmatprep.subr.mxu0 0.0
    %1149 = vmatpush1.msra.mxu0 0.0
    %1150 = vmatprep.subr.mxu0 0.0
    %1151 = vmatpush1.msra.mxu0 0.0
    %1152 = vmatprep.subr.mxu0 0.0
    %1153 = vmatpush1.msra.mxu0 0.0
    %1154 = vmatprep.subr.mxu0 0.0
    %1155 = vmatpush1.msra.mxu0 0.0
    %1156 = vmatprep.subr.mxu0 0.0
    %1157 = vmatpush1.msra.mxu0 0.0
    %1158 = vmatprep.subr.mxu0 0.0
    %1159 = vmatpush1.msra.mxu0 %v48
    %1160 = vmatprep.subr.mxu0 0.0
    %1161 = vmatpush1.msra.mxu0 %v47
    %1162 = vmatprep.subr.mxu0 0.0
    %1163 = vmatpush1.msra.mxu0 %v46
    %1164 = vmatprep.subr.mxu0 0.0
    %1165 = vmatpush1.msra.mxu0 %v45
    %1166 = vmatprep.subr.mxu0 0.0
    %1167 = vmatpush2.msra.mxu0 0.0
    %1168 = vmatprep.subr.mxu0 0.0
    %1169 = vmatpush2.msra.mxu0 0.0
    %1170 = vmatprep.subr.mxu0 0.0
    %1171 = vmatpush2.msra.mxu0 0.0
    %1172 = vmatprep.subr.mxu0 0.0
    %1173 = vmatpush2.msra.mxu0 0.0
    %1174 = vmatprep.subr.mxu0 0.0
    %1175 = vmatpush2.msra.mxu0 0.0
    %1176 = vmatprep.subr.mxu0 0.0
    %1177 = vmatpush2.msra.mxu0 0.0
    %1178 = vmatprep.subr.mxu0 0.0
    %1179 = vmatpush2.msra.mxu0 0.0
    %1180 = vmatprep.subr.mxu0 0.0
    %1181 = vmatpush2.msra.mxu0 0.0
    %1182 = vmatprep.subr.mxu0 0.0
    %1183 = vmatpush2.msra.mxu0 0.0
    %1184 = vmatprep.subr.mxu0 0.0
    %1185 = vmatpush2.msra.mxu0 0.0
    %1186 = vmatprep.subr.mxu0 0.0
    %1187 = vmatpush2.msra.mxu0 0.0
    %1188 = vmatprep.subr.mxu0 0.0
    %1189 = vmatpush2.msra.mxu0 0.0
    %1190 = vmatprep.subr.mxu0 0.0
    %1191 = vmatpush2.msra.mxu0 0.0
    %1192 = vmatprep.subr.mxu0 0.0
    %1193 = vmatpush2.msra.mxu0 0.0
    %1194 = vmatprep.subr.mxu0 0.0
    %1195 = vmatpush2.msra.mxu0 0.0
    %1196 = vmatprep.subr.mxu0 0.0
    %1197 = vmatpush2.msra.mxu0 0.0
    %1198 = vmatprep.mubr.f32.mxu0 0.0
    %1199 = vmatmul.mubr.f32.gmra.mxu0 %v1062
    %v1200 = vpop.f32.mrf.mxu0
    %v1201 = vadd.f32 0.0, %v1200
    %v1202 = vpop.f32.mrf.mxu0
    %1203 = vdwg.mxu0
    %v1204 = vrcp.pop %v1201
    %v1205 = vmul.f32 %v1131, %v1204
    %v1206 = vadd.f32 %v786, %v1205
    %v1207 = vlaneseq
    %v1208 = vshrl.u32 %v1207, 7
    %v1209 = vsub.s32 0, %v1208
    %v1210 = vrot.slane %v808, %v1209
    %v1211 = vadd.f32 %v1206, %v1210
    %v1212 = vsel %vm163, %v1211, 0.0
    %v1213 = vrot.slane %v1212, 4
    %v1214 = vadd.f32 %v1212, %v1213
    %v1215 = vrot.slane %v1214, 2
    %v1216 = vadd.f32 %v1214, %v1215
    %v1217 = vrot.slane %v1216, 1
    %v1218 = vadd.f32 %v1216, %v1217
    %v1219 = vmul.f32 %v1218, %v568
    %v1220 = vmul.f32 %v1211, %v1211
    %v1221 = vsel %vm163, %v1220, 0.0
    %v1222 = vrot.slane %v1221, 4
    %v1223 = vadd.f32 %v1221, %v1222
    %v1224 = vrot.slane %v1223, 2
    %v1225 = vadd.f32 %v1223, %v1224
    %v1226 = vrot.slane %v1225, 1
    %v1227 = vadd.f32 %v1225, %v1226
    %v1228 = vmul.f32 %v1227, %v568
    %v1229 = vmul.f32 %v1219, %v1219
    %v1230 = vsub.f32 %v1228, %v1229
    %v1231 = vmax.f32 %v1230, 0.0
    %v1232 = vsub.f32 %v1211, %v1219
    %v1233 = vadd.f32 %v1231, 1e-05
    %v1234 = vrsqrt.pop %v1233
    %v1235 = vmul.f32 %v1232, %v1234
    %v1236 = vlaneseq
    %v1237 = vshrl.u32 %v1236, 7
    %v1238 = vsub.s32 0, %v1237
    %v1239 = vrot.slane %v809, %v1238
    %v1240 = vmul.f32 %v1235, %v1239
    %v1241 = vlaneseq
    %v1242 = vshrl.u32 %v1241, 7
    %v1243 = vsub.s32 0, %v1242
    %v1244 = vrot.slane %v810, %v1243
    %v1245 = vadd.f32 %v1240, %v1244
    %v1246 = vlaneseq
    %v1247 = vshrl.u32 %v1246, 7
    %v1248 = vsub.s32 0, %v1247
    %v1249 = vrot.slane %v811, %v1248
    %v1251 = vsel %vm163, %v1245, 0
    %1253 = vmatprep.subr.mxu0 0.0
    %1254 = vmatpush1.msra.mxu0 0.0
    %1255 = vmatprep.subr.mxu0 0.0
    %1256 = vmatpush1.msra.mxu0 0.0
    %1257 = vmatprep.subr.mxu0 0.0
    %1258 = vmatpush1.msra.mxu0 0.0
    %1259 = vmatprep.subr.mxu0 0.0
    %1260 = vmatpush1.msra.mxu0 0.0
    %1261 = vmatprep.subr.mxu0 0.0
    %1262 = vmatpush1.msra.mxu0 0.0
    %1263 = vmatprep.subr.mxu0 0.0
    %1264 = vmatpush1.msra.mxu0 0.0
    %1265 = vmatprep.subr.mxu0 0.0
    %1266 = vmatpush1.msra.mxu0 0.0
    %1267 = vmatprep.subr.mxu0 0.0
    %1268 = vmatpush1.msra.mxu0 0.0
    %1269 = vmatprep.subr.mxu0 0.0
    %1270 = vmatpush1.msra.mxu0 0.0
    %1271 = vmatprep.subr.mxu0 0.0
    %1272 = vmatpush1.msra.mxu0 0.0
    %1273 = vmatprep.subr.mxu0 0.0
    %1274 = vmatpush1.msra.mxu0 0.0
    %1275 = vmatprep.subr.mxu0 0.0
    %1276 = vmatpush1.msra.mxu0 0.0
    %1277 = vmatprep.subr.mxu0 0.0
    %1278 = vmatpush1.msra.mxu0 %v798
    %1279 = vmatprep.subr.mxu0 0.0
    %1280 = vmatpush1.msra.mxu0 %v797
    %1281 = vmatprep.subr.mxu0 0.0
    %1282 = vmatpush1.msra.mxu0 %v796
    %1283 = vmatprep.subr.mxu0 0.0
    %1284 = vmatpush1.msra.mxu0 %v795
    %1285 = vmatprep.subr.mxu0 0.0
    %1286 = vmatpush2.msra.mxu0 0.0
    %1287 = vmatprep.subr.mxu0 0.0
    %1288 = vmatpush2.msra.mxu0 0.0
    %1289 = vmatprep.subr.mxu0 0.0
    %1290 = vmatpush2.msra.mxu0 0.0
    %1291 = vmatprep.subr.mxu0 0.0
    %1292 = vmatpush2.msra.mxu0 0.0
    %1293 = vmatprep.subr.mxu0 0.0
    %1294 = vmatpush2.msra.mxu0 0.0
    %1295 = vmatprep.subr.mxu0 0.0
    %1296 = vmatpush2.msra.mxu0 0.0
    %1297 = vmatprep.subr.mxu0 0.0
    %1298 = vmatpush2.msra.mxu0 0.0
    %1299 = vmatprep.subr.mxu0 0.0
    %1300 = vmatpush2.msra.mxu0 0.0
    %1301 = vmatprep.subr.mxu0 0.0
    %1302 = vmatpush2.msra.mxu0 0.0
    %1303 = vmatprep.subr.mxu0 0.0
    %1304 = vmatpush2.msra.mxu0 0.0
    %1305 = vmatprep.subr.mxu0 0.0
    %1306 = vmatpush2.msra.mxu0 0.0
    %1307 = vmatprep.subr.mxu0 0.0
    %1308 = vmatpush2.msra.mxu0 0.0
    %1309 = vmatprep.subr.mxu0 0.0
    %1310 = vmatpush2.msra.mxu0 0.0
    %1311 = vmatprep.subr.mxu0 0.0
    %1312 = vmatpush2.msra.mxu0 0.0
    %1313 = vmatprep.subr.mxu0 0.0
    %1314 = vmatpush2.msra.mxu0 0.0
    %1315 = vmatprep.subr.mxu0 0.0
    %1316 = vmatpush2.msra.mxu0 0.0
    %1317 = vmatprep.mubr.f32.mxu0 0.0
    %1318 = vmatmul.mubr.f32.gmra.mxu0 %v1251
    %v1319 = vpop.f32.mrf.mxu0
    %v1320 = vadd.f32 %v1249, %v1319
    %v1321 = vpop.f32.mrf.mxu0
    %1322 = vdwg.mxu0
    %v1323 = vmax.f32 %v1320, 0.0
    %v1324 = vlaneseq
    %v1325 = vshrl.u32 %v1324, 7
    %v1326 = vsub.s32 0, %v1325
    %v1327 = vrot.slane %v812, %v1326
    %v1329 = vsel %vm678, %v1323, 0
    %1331 = vmatprep.subr.mxu0 0.0
    %1332 = vmatpush1.msra.mxu0 0.0
    %1333 = vmatprep.subr.mxu0 0.0
    %1334 = vmatpush1.msra.mxu0 0.0
    %1335 = vmatprep.subr.mxu0 0.0
    %1336 = vmatpush1.msra.mxu0 0.0
    %1337 = vmatprep.subr.mxu0 0.0
    %1338 = vmatpush1.msra.mxu0 0.0
    %1339 = vmatprep.subr.mxu0 0.0
    %1340 = vmatpush1.msra.mxu0 0.0
    %1341 = vmatprep.subr.mxu0 0.0
    %1342 = vmatpush1.msra.mxu0 0.0
    %1343 = vmatprep.subr.mxu0 0.0
    %1344 = vmatpush1.msra.mxu0 0.0
    %1345 = vmatprep.subr.mxu0 0.0
    %1346 = vmatpush1.msra.mxu0 0.0
    %1347 = vmatprep.subr.mxu0 0.0
    %1348 = vmatpush1.msra.mxu0 %v806
    %1349 = vmatprep.subr.mxu0 0.0
    %1350 = vmatpush1.msra.mxu0 %v805
    %1351 = vmatprep.subr.mxu0 0.0
    %1352 = vmatpush1.msra.mxu0 %v804
    %1353 = vmatprep.subr.mxu0 0.0
    %1354 = vmatpush1.msra.mxu0 %v803
    %1355 = vmatprep.subr.mxu0 0.0
    %1356 = vmatpush1.msra.mxu0 %v802
    %1357 = vmatprep.subr.mxu0 0.0
    %1358 = vmatpush1.msra.mxu0 %v801
    %1359 = vmatprep.subr.mxu0 0.0
    %1360 = vmatpush1.msra.mxu0 %v800
    %1361 = vmatprep.subr.mxu0 0.0
    %1362 = vmatpush1.msra.mxu0 %v799
    %1363 = vmatprep.subr.mxu0 0.0
    %1364 = vmatpush2.msra.mxu0 0.0
    %1365 = vmatprep.subr.mxu0 0.0
    %1366 = vmatpush2.msra.mxu0 0.0
    %1367 = vmatprep.subr.mxu0 0.0
    %1368 = vmatpush2.msra.mxu0 0.0
    %1369 = vmatprep.subr.mxu0 0.0
    %1370 = vmatpush2.msra.mxu0 0.0
    %1371 = vmatprep.subr.mxu0 0.0
    %1372 = vmatpush2.msra.mxu0 0.0
    %1373 = vmatprep.subr.mxu0 0.0
    %1374 = vmatpush2.msra.mxu0 0.0
    %1375 = vmatprep.subr.mxu0 0.0
    %1376 = vmatpush2.msra.mxu0 0.0
    %1377 = vmatprep.subr.mxu0 0.0
    %1378 = vmatpush2.msra.mxu0 0.0
    %1379 = vmatprep.subr.mxu0 0.0
    %1380 = vmatpush2.msra.mxu0 0.0
    %1381 = vmatprep.subr.mxu0 0.0
    %1382 = vmatpush2.msra.mxu0 0.0
    %1383 = vmatprep.subr.mxu0 0.0
    %1384 = vmatpush2.msra.mxu0 0.0
    %1385 = vmatprep.subr.mxu0 0.0
    %1386 = vmatpush2.msra.mxu0 0.0
    %1387 = vmatprep.subr.mxu0 0.0
    %1388 = vmatpush2.msra.mxu0 0.0
    %1389 = vmatprep.subr.mxu0 0.0
    %1390 = vmatpush2.msra.mxu0 0.0
    %1391 = vmatprep.subr.mxu0 0.0
    %1392 = vmatpush2.msra.mxu0 0.0
    %1393 = vmatprep.subr.mxu0 0.0
    %1394 = vmatpush2.msra.mxu0 0.0
    %1395 = vmatprep.mubr.f32.mxu0 0.0
    %1396 = vmatmul.mubr.f32.gmra.mxu0 %v1329
    %v1397 = vpop.f32.mrf.mxu0
    %v1398 = vadd.f32 %v1327, %v1397
    %v1399 = vpop.f32.mrf.mxu0
    %1400 = vdwg.mxu0
    %v1401 = vadd.f32 %v1245, %v1398
    %v1402 = vsel %vm163, %v1401, 0.0
    %v1403 = vrot.slane %v1402, 4
    %v1404 = vadd.f32 %v1402, %v1403
    %v1405 = vrot.slane %v1404, 2
    %v1406 = vadd.f32 %v1404, %v1405
    %v1407 = vrot.slane %v1406, 1
    %v1408 = vadd.f32 %v1406, %v1407
    %v1409 = vmul.f32 %v1408, %v568
    %v1410 = vmul.f32 %v1401, %v1401
    %v1411 = vsel %vm163, %v1410, 0.0
    %v1412 = vrot.slane %v1411, 4
    %v1413 = vadd.f32 %v1411, %v1412
    %v1414 = vrot.slane %v1413, 2
    %v1415 = vadd.f32 %v1413, %v1414
    %v1416 = vrot.slane %v1415, 1
    %v1417 = vadd.f32 %v1415, %v1416
    %v1418 = vmul.f32 %v1417, %v568
    %v1419 = vmul.f32 %v1409, %v1409
    %v1420 = vsub.f32 %v1418, %v1419
    %v1421 = vmax.f32 %v1420, 0.0
    %v1422 = vsub.f32 %v1401, %v1409
    %v1423 = vadd.f32 %v1421, 1e-05
    %v1424 = vrsqrt.pop %v1423
    %v1425 = vmul.f32 %v1422, %v1424
    %v1426 = vlaneseq
    %v1427 = vshrl.u32 %v1426, 7
    %v1428 = vsub.s32 0, %v1427
    %v1429 = vrot.slane %v813, %v1428
    %v1430 = vmul.f32 %v1425, %v1429
    %v1431 = vlaneseq
    %v1432 = vshrl.u32 %v1431, 7
    %v1433 = vsub.s32 0, %v1432
    %v1434 = vrot.slane %v814, %v1433
    %v1435 = vadd.f32 %v1430, %v1434
    %v1436 = vld [vmem:[#allocation2 + $0x148] sm:$0xff]
    %v1437 = vld [vmem:[#allocation2 + $0x150] sm:$0xff]
    %v1438 = vld [vmem:[#allocation2 + $0x158] sm:$0xff]
    %v1439 = vld [vmem:[#allocation2 + $0x160] sm:$0xff]
    %v1440 = vld [vmem:[#allocation4 + $0x11] sm:$0x1]
    %v1441 = vlaneseq
    %v1442 = vshrl.u32 %v1441, 7
    %v1443 = vsub.s32 0, %v1442
    %v1444 = vrot.slane %v1440, %v1443
    %v1446 = vsel %vm163, %v1435, 0
    %1448 = vmatprep.subr.mxu0 0.0
    %1449 = vmatpush1.msra.mxu0 0.0
    %1450 = vmatprep.subr.mxu0 0.0
    %1451 = vmatpush1.msra.mxu0 0.0
    %1452 = vmatprep.subr.mxu0 0.0
    %1453 = vmatpush1.msra.mxu0 0.0
    %1454 = vmatprep.subr.mxu0 0.0
    %1455 = vmatpush1.msra.mxu0 0.0
    %1456 = vmatprep.subr.mxu0 0.0
    %1457 = vmatpush1.msra.mxu0 0.0
    %1458 = vmatprep.subr.mxu0 0.0
    %1459 = vmatpush1.msra.mxu0 0.0
    %1460 = vmatprep.subr.mxu0 0.0
    %1461 = vmatpush1.msra.mxu0 0.0
    %1462 = vmatprep.subr.mxu0 0.0
    %1463 = vmatpush1.msra.mxu0 0.0
    %1464 = vmatprep.subr.mxu0 0.0
    %1465 = vmatpush1.msra.mxu0 0.0
    %1466 = vmatprep.subr.mxu0 0.0
    %1467 = vmatpush1.msra.mxu0 0.0
    %1468 = vmatprep.subr.mxu0 0.0
    %1469 = vmatpush1.msra.mxu0 0.0
    %1470 = vmatprep.subr.mxu0 0.0
    %1471 = vmatpush1.msra.mxu0 0.0
    %1472 = vmatprep.subr.mxu0 0.0
    %1473 = vmatpush1.msra.mxu0 %v1439
    %1474 = vmatprep.subr.mxu0 0.0
    %1475 = vmatpush1.msra.mxu0 %v1438
    %1476 = vmatprep.subr.mxu0 0.0
    %1477 = vmatpush1.msra.mxu0 %v1437
    %1478 = vmatprep.subr.mxu0 0.0
    %1479 = vmatpush1.msra.mxu0 %v1436
    %1480 = vmatprep.subr.mxu0 0.0
    %1481 = vmatpush2.msra.mxu0 0.0
    %1482 = vmatprep.subr.mxu0 0.0
    %1483 = vmatpush2.msra.mxu0 0.0
    %1484 = vmatprep.subr.mxu0 0.0
    %1485 = vmatpush2.msra.mxu0 0.0
    %1486 = vmatprep.subr.mxu0 0.0
    %1487 = vmatpush2.msra.mxu0 0.0
    %1488 = vmatprep.subr.mxu0 0.0
    %1489 = vmatpush2.msra.mxu0 0.0
    %1490 = vmatprep.subr.mxu0 0.0
    %1491 = vmatpush2.msra.mxu0 0.0
    %1492 = vmatprep.subr.mxu0 0.0
    %1493 = vmatpush2.msra.mxu0 0.0
    %1494 = vmatprep.subr.mxu0 0.0
    %1495 = vmatpush2.msra.mxu0 0.0
    %1496 = vmatprep.subr.mxu0 0.0
    %1497 = vmatpush2.msra.mxu0 0.0
    %1498 = vmatprep.subr.mxu0 0.0
    %1499 = vmatpush2.msra.mxu0 0.0
    %1500 = vmatprep.subr.mxu0 0.0
    %1501 = vmatpush2.msra.mxu0 0.0
    %1502 = vmatprep.subr.mxu0 0.0
    %1503 = vmatpush2.msra.mxu0 0.0
    %1504 = vmatprep.subr.mxu0 0.0
    %1505 = vmatpush2.msra.mxu0 0.0
    %1506 = vmatprep.subr.mxu0 0.0
    %1507 = vmatpush2.msra.mxu0 0.0
    %1508 = vmatprep.subr.mxu0 0.0
    %1509 = vmatpush2.msra.mxu0 0.0
    %1510 = vmatprep.subr.mxu0 0.0
    %1511 = vmatpush2.msra.mxu0 0.0
    %1512 = vmatprep.mubr.f32.mxu0 0.0
    %1513 = vmatmul.mubr.f32.gmra.mxu0 %v1446
    %v1514 = vpop.f32.mrf.mxu0
    %v1515 = vadd.f32 %v1444, %v1514
    %v1516 = vpop.f32.mrf.mxu0
    %1517 = vdwg.mxu0
    %1518 = vst [vmem:[%s4] sm:$0xff] %v1515
    // Predicated region
    $region26: #{model_forward.1} parent=1 // pred_check
      _
    $region27: #{model_forward.1} parent=1 // pred_check_branch
      %1520 = sbr.rel (0) target = $region29
    $region28: #{model_forward.1} parent=1 // pred_region
      _
    $region29: #{model_forward.1} parent=1 // pred_fallthru
      _
    // Predicated region
    $region30: #{model_forward.1} parent=1 // pred_check
      _
    $region31: #{model_forward.1} parent=1 // pred_check_branch
      %1522 = sbr.rel (0) target = $region33
    $region32: #{model_forward.1} parent=1 // pred_region
      _
    $region33: #{model_forward.1} parent=1 // pred_fallthru
      _
    %1523 = vsyncpa [#allocation3], 1
    %1524 = vsyncpa [#allocation5], 1

</llo_original>
